<compile_context>
chip_gen: v6e
topology: v6e:2x2x1
jax: 0.10.0
libtpu: 0.0.40
codegen_flags: <defaults>
</compile_context>

<pallas_src>
import functools

import jax
import jax.numpy as jnp
from jax.experimental import pallas as pl

# ---- problem sizes (small, consistent with the module) ----
BATCH = 2
SEQ = 8
EMBED = 32
HEADS = 4
HEAD_DIM = EMBED // HEADS
FWD_EXP = 4
FFN = FWD_EXP * EMBED
EPS = 1e-5  # nn.LayerNorm default


def _layernorm(x, gamma, beta):
    mu = jnp.mean(x, axis=-1, keepdims=True)
    var = jnp.mean((x - mu) ** 2, axis=-1, keepdims=True)
    return (x - mu) * jax.lax.rsqrt(var + EPS) * gamma + beta


def _transformer_block_kernel(qh_ref, kt_ref, vh_ref, qres_ref, amask_ref,
                              wfc_ref, w1_ref, b1_ref, w2_ref, vecs_ref,
                              out_ref, *, batch):
    B = batch
    HB, S, D = qh_ref.shape           # fused (head*batch), seq, head_dim
    H = HB // B
    E = qres_ref.shape[-1]

    # ---- unpack the stacked (6, E) parameter slab (static slices, no copies) ----
    vecs = vecs_ref[...]
    bfc, g1, beta1 = vecs[0:1], vecs[1:2], vecs[2:3]
    b2, g2, beta2 = vecs[3:4], vecs[4:5], vecs[5:6]

    # ---- batched multi-head attention over the fused (head*batch) dim ----
    scale = jnp.float32(1.0 / (E ** 0.5))
    qh = qh_ref[...] * scale                                  # scale folded into q
    energy = jnp.einsum('gqd,gdk->gqk', qh, kt_ref[...],
                        preferred_element_type=jnp.float32)   # (H*B, S, S)
    energy = energy + amask_ref[...][None, :, :]              # additive mask

    m = jnp.max(energy, axis=-1, keepdims=True)
    p = jnp.exp(energy - m)
    denom = jnp.sum(p, axis=-1, keepdims=True)
    attn = p / denom                                          # exact divide (safe, free here)

    head_out = jnp.einsum('gqk,gkd->gqd', attn, vh_ref[...],
                          preferred_element_type=jnp.float32)  # (H*B, S, D)

    # ---- fc_out with the head concat fused in:
    #      out[b,q,:] = sum_h head_out[h,b,q,:] @ wfc[h] ----
    per_head = jnp.einsum('hbqd,hde->hbqe', head_out.reshape(H, B, S, D),
                          wfc_ref[...],
                          preferred_element_type=jnp.float32)  # (H, B, S, E)
    attn_fc = jnp.sum(per_head, axis=0).reshape(B * S, E) + bfc

    # ---- residual + norm1 (dropout == identity at inference) ----
    x1 = _layernorm(attn_fc + qres_ref[...], g1, beta1)

    # ---- feed-forward ----
    h1 = jnp.maximum(
        jnp.dot(x1, w1_ref[...], preferred_element_type=jnp.float32) + b1_ref[...],
        0.0)
    f = jnp.dot(h1, w2_ref[...], preferred_element_type=jnp.float32) + b2

    # ---- residual + norm2 (dropout == identity at inference) ----
    out_ref[...] = _layernorm(f + x1, g2, beta2).astype(out_ref.dtype)


def transformer_block(value, key, query, mask2d, params):
    N, S, E = query.shape
    H = HEADS
    D = E // H
    assert mask2d.shape == (S, S)

    # Layout plumbing (outside the kernel), heads-major fused dim g = h*N + b.
    def to_heads(x):                    # (N, S, E) -> (H*N, S, D)
        return x.reshape(N, S, H, D).transpose(2, 0, 1, 3).reshape(H * N, S, D)

    def to_heads_t(x):                  # (N, S, E) -> (H*N, D, S)  (K pre-transposed)
        return x.reshape(N, S, H, D).transpose(2, 0, 3, 1).reshape(H * N, D, S)

    qh = to_heads(query)
    kt = to_heads_t(key)
    vh = to_heads(value)
    qres = query.reshape(N * S, E)                                   # residual, 2-D

    # Additive mask (0 where kept, -1e20 where mask == 0).
    amask = jnp.where(mask2d == 0, jnp.float32(-1e20), jnp.float32(0.0))

    wfc = params["wfc"].reshape(H, D, E)                             # no tiling
    # Stack the six E-wide parameter vectors into one (6, E) slab.
    vecE = jnp.concatenate([params["bfc"], params["g1"], params["beta1"],
                            params["b2"], params["g2"], params["beta2"]], axis=0)

    def const_spec(shape):
        nd = len(shape)
        return pl.BlockSpec(shape, lambda i, _nd=nd: (0,) * _nd)

    inputs = [qh, kt, vh, qres, amask, wfc, params["w1"], params["b1"],
              params["w2"], vecE]

    out2d = pl.pallas_call(
        functools.partial(_transformer_block_kernel, batch=N),
        out_shape=jax.ShapeDtypeStruct((N * S, E), jnp.float32),
        grid=(1,),                                                   # single invocation
        in_specs=[const_spec(x.shape) for x in inputs],
        out_specs=pl.BlockSpec((N * S, E), lambda i: (0, 0)),
    )(*inputs)

    return out2d.reshape(N, S, E)


def _reference(value, key, query, mask2d, params):
    """Pure-JAX reference mirroring the PyTorch forward exactly."""
    N, S, E = query.shape
    q = query.reshape(N, S, HEADS, HEAD_DIM)
    k = key.reshape(N, S, HEADS, HEAD_DIM)
    v = value.reshape(N, S, HEADS, HEAD_DIM)
    energy = jnp.einsum('nqhd,nkhd->nhqk', q, k)
    energy = jnp.where(mask2d[None, None, :, :] == 0, -1e20, energy)
    attn = jax.nn.softmax(energy / (E ** 0.5), axis=3)
    out = jnp.einsum('nhql,nlhd->nqhd', attn, v).reshape(N, S, E)
    out = out @ params["wfc"] + params["bfc"][0]

    def ln(x, g, b):
        mu = x.mean(-1, keepdims=True)
        var = ((x - mu) ** 2).mean(-1, keepdims=True)
        return (x - mu) / jnp.sqrt(var + EPS) * g[0] + b[0]

    x1 = ln(out + query, params["g1"], params["beta1"])
    h1 = jax.nn.relu(x1 @ params["w1"] + params["b1"][0])
    f = h1 @ params["w2"] + params["b2"][0]
    return ln(f + x1, params["g2"], params["beta2"])


def _init_params(key):
    ks = jax.random.split(key, 6)
    s = 0.05
    return {
        "wfc":   s * jax.random.normal(ks[0], (EMBED, EMBED), jnp.float32),
        "bfc":   s * jax.random.normal(ks[1], (1, EMBED), jnp.float32),
        "g1":    jnp.ones((1, EMBED), jnp.float32),
        "beta1": jnp.zeros((1, EMBED), jnp.float32),
        "w1":    s * jax.random.normal(ks[2], (EMBED, FFN), jnp.float32),
        "b1":    s * jax.random.normal(ks[3], (1, FFN), jnp.float32),
        "w2":    s * jax.random.normal(ks[4], (FFN, EMBED), jnp.float32),
        "b2":    s * jax.random.normal(ks[5], (1, EMBED), jnp.float32),
        "g2":    jnp.ones((1, EMBED), jnp.float32),
        "beta2": jnp.zeros((1, EMBED), jnp.float32),
    }


if __name__ == "__main__":
    root = jax.random.PRNGKey(0)
    k_v, k_k, k_q, k_p = jax.random.split(root, 4)

    value = jax.random.normal(k_v, (BATCH, SEQ, EMBED), jnp.float32)
    key_in = jax.random.normal(k_k, (BATCH, SEQ, EMBED), jnp.float32)
    query = jax.random.normal(k_q, (BATCH, SEQ, EMBED), jnp.float32)
    # causal mask, shared across batch (PyTorch masked_fill on mask == 0)
    mask2d = jnp.tril(jnp.ones((SEQ, SEQ), jnp.float32))

    params = _init_params(k_p)

    out = transformer_block(value, key_in, query, mask2d, params)
    out = jax.block_until_ready(out)

    ref = _reference(value, key_in, query, mask2d, params)
    assert out.shape == (BATCH, SEQ, EMBED)
    err = jnp.abs(out - ref).max()
    assert jnp.allclose(out, ref, rtol=1e-4, atol=1e-4), f"max diff {err}"

    print("KERNEL_OK")
</pallas_src>

<mosaic_0001>
module attributes {stable_mosaic.version = 11 : i64} {
  func.func @_transformer_block_kernel(%arg0: i32, %arg1: memref<8x8x8xf32, #tpu.memory_space<vmem>>, %arg2: memref<8x8x8xf32, #tpu.memory_space<vmem>>, %arg3: memref<8x8x8xf32, #tpu.memory_space<vmem>>, %arg4: memref<16x32xf32, #tpu.memory_space<vmem>>, %arg5: memref<8x8xf32, #tpu.memory_space<vmem>>, %arg6: memref<4x8x32xf32, #tpu.memory_space<vmem>>, %arg7: memref<32x128xf32, #tpu.memory_space<vmem>>, %arg8: memref<1x128xf32, #tpu.memory_space<vmem>>, %arg9: memref<128x32xf32, #tpu.memory_space<vmem>>, %arg10: memref<6x32xf32, #tpu.memory_space<vmem>>, %arg11: memref<16x32xf32, #tpu.memory_space<vmem>>) attributes {dimension_semantics = [#tpu.dimension_semantics<arbitrary>], iteration_bounds = array<i64: 1>, scalar_prefetch = 0 : i64, scratch_operands = 0 : i64, tpu.core_type = #tpu.core_type<tc>, window_params = [{pipeline_mode = #tpu.pipeline_mode<synchronous>, transform_indices = @transform_0, window_bounds = array<i64: 8, 8, 8>}, {pipeline_mode = #tpu.pipeline_mode<synchronous>, transform_indices = @transform_1, window_bounds = array<i64: 8, 8, 8>}, {pipeline_mode = #tpu.pipeline_mode<synchronous>, transform_indices = @transform_2, window_bounds = array<i64: 8, 8, 8>}, {pipeline_mode = #tpu.pipeline_mode<synchronous>, transform_indices = @transform_3, window_bounds = array<i64: 16, 32>}, {pipeline_mode = #tpu.pipeline_mode<synchronous>, transform_indices = @transform_4, window_bounds = array<i64: 8, 8>}, {pipeline_mode = #tpu.pipeline_mode<synchronous>, transform_indices = @transform_5, window_bounds = array<i64: 4, 8, 32>}, {pipeline_mode = #tpu.pipeline_mode<synchronous>, transform_indices = @transform_6, window_bounds = array<i64: 32, 128>}, {pipeline_mode = #tpu.pipeline_mode<synchronous>, transform_indices = @transform_7, window_bounds = array<i64: 1, 128>}, {pipeline_mode = #tpu.pipeline_mode<synchronous>, transform_indices = @transform_8, window_bounds = array<i64: 128, 32>}, {pipeline_mode = #tpu.pipeline_mode<synchronous>, transform_indices = @transform_9, window_bounds = array<i64: 6, 32>}, {pipeline_mode = #tpu.pipeline_mode<synchronous>, transform_indices = @transform_10, window_bounds = array<i64: 16, 32>}]} {
    %c0 = arith.constant 0 : index
    %c0_0 = arith.constant 0 : index
    %0 = vector.load %arg10[%c0, %c0_0] : memref<6x32xf32, #tpu.memory_space<vmem>>, vector<6x32xf32>
    %1 = vector.extract_strided_slice %0 {offsets = [0, 0], sizes = [1, 32], strides = [1, 1]} : vector<6x32xf32> to vector<1x32xf32>
    %2 = vector.extract_strided_slice %0 {offsets = [1, 0], sizes = [1, 32], strides = [1, 1]} : vector<6x32xf32> to vector<1x32xf32>
    %3 = vector.extract_strided_slice %0 {offsets = [2, 0], sizes = [1, 32], strides = [1, 1]} : vector<6x32xf32> to vector<1x32xf32>
    %4 = vector.extract_strided_slice %0 {offsets = [3, 0], sizes = [1, 32], strides = [1, 1]} : vector<6x32xf32> to vector<1x32xf32>
    %5 = vector.extract_strided_slice %0 {offsets = [4, 0], sizes = [1, 32], strides = [1, 1]} : vector<6x32xf32> to vector<1x32xf32>
    %6 = vector.extract_strided_slice %0 {offsets = [5, 0], sizes = [1, 32], strides = [1, 1]} : vector<6x32xf32> to vector<1x32xf32>
    %c0_1 = arith.constant 0 : index
    %c0_2 = arith.constant 0 : index
    %c0_3 = arith.constant 0 : index
    %7 = vector.load %arg1[%c0_1, %c0_2, %c0_3] : memref<8x8x8xf32, #tpu.memory_space<vmem>>, vector<8x8x8xf32>
    %cst = arith.constant 0.176776692 : f32
    %8 = vector.broadcast %cst : f32 to vector<8x8x8xf32>
    %9 = arith.mulf %7, %8 : vector<8x8x8xf32>
    %c0_4 = arith.constant 0 : index
    %c0_5 = arith.constant 0 : index
    %c0_6 = arith.constant 0 : index
    %10 = vector.load %arg2[%c0_4, %c0_5, %c0_6] : memref<8x8x8xf32, #tpu.memory_space<vmem>>, vector<8x8x8xf32>
    "tpu.trace_start"() <{level = 10 : i32, message = "gqd,gdk->gqk"}> : () -> ()
    %cst_7 = arith.constant dense<0.000000e+00> : vector<8x8x8xf32>
    %11 = tpu.matmul %9, %10, %cst_7 {dimension_numbers = #tpu.dot_dimension_numbers<[2], [1], [1], [2], [0, 0, 0, 1, 1, 2], [0], [0]>} : vector<8x8x8xf32>, vector<8x8x8xf32>, vector<8x8x8xf32> -> vector<8x8x8xf32>
    "tpu.trace_stop"() : () -> ()
    %c0_8 = arith.constant 0 : index
    %c0_9 = arith.constant 0 : index
    %12 = vector.load %arg5[%c0_8, %c0_9] : memref<8x8xf32, #tpu.memory_space<vmem>>, vector<8x8xf32>
    %13 = vector.shape_cast %12 : vector<8x8xf32> to vector<1x8x8xf32>
    %14 = vector.broadcast %13 : vector<1x8x8xf32> to vector<8x8x8xf32>
    %15 = arith.addf %11, %14 : vector<8x8x8xf32>
    %cst_10 = arith.constant dense<0xFF800000> : vector<8x8xf32>
    %16 = vector.multi_reduction <maximumf>, %15, %cst_10 [2] : vector<8x8x8xf32> to vector<8x8xf32>
    %17 = vector.shape_cast %16 : vector<8x8xf32> to vector<8x8x1xf32>
    %18 = vector.broadcast %17 : vector<8x8x1xf32> to vector<8x8x8xf32>
    %19 = arith.subf %15, %18 : vector<8x8x8xf32>
    %20 = math.exp %19 : vector<8x8x8xf32>
    %cst_11 = arith.constant dense<0.000000e+00> : vector<8x8xf32>
    %21 = vector.multi_reduction <add>, %20, %cst_11 [2] : vector<8x8x8xf32> to vector<8x8xf32>
    %22 = vector.shape_cast %21 : vector<8x8xf32> to vector<8x8x1xf32>
    %23 = vector.broadcast %22 : vector<8x8x1xf32> to vector<8x8x8xf32>
    %24 = arith.divf %20, %23 : vector<8x8x8xf32>
    %c0_12 = arith.constant 0 : index
    %c0_13 = arith.constant 0 : index
    %c0_14 = arith.constant 0 : index
    %25 = vector.load %arg3[%c0_12, %c0_13, %c0_14] : memref<8x8x8xf32, #tpu.memory_space<vmem>>, vector<8x8x8xf32>
    "tpu.trace_start"() <{level = 10 : i32, message = "gqk,gkd->gqd"}> : () -> ()
    %cst_15 = arith.constant dense<0.000000e+00> : vector<8x8x8xf32>
    %26 = tpu.matmul %24, %25, %cst_15 {dimension_numbers = #tpu.dot_dimension_numbers<[2], [1], [1], [2], [0, 0, 0, 1, 1, 2], [0], [0]>} : vector<8x8x8xf32>, vector<8x8x8xf32>, vector<8x8x8xf32> -> vector<8x8x8xf32>
    "tpu.trace_stop"() : () -> ()
    %27 = vector.shape_cast %26 : vector<8x8x8xf32> to vector<4x2x8x8xf32>
    %c0_16 = arith.constant 0 : index
    %c0_17 = arith.constant 0 : index
    %c0_18 = arith.constant 0 : index
    %28 = vector.load %arg6[%c0_16, %c0_17, %c0_18] : memref<4x8x32xf32, #tpu.memory_space<vmem>>, vector<4x8x32xf32>
    "tpu.trace_start"() <{level = 10 : i32, message = "hbqd,hde->hbqe"}> : () -> ()
    %cst_19 = arith.constant dense<0.000000e+00> : vector<4x2x8x32xf32>
    %29 = tpu.matmul %27, %28, %cst_19 {dimension_numbers = #tpu.dot_dimension_numbers<[3], [1], [1, 2], [2], [0, 0, 0, 1, 0, 2, 1, 2], [0], [0]>} : vector<4x2x8x8xf32>, vector<4x8x32xf32>, vector<4x2x8x32xf32> -> vector<4x2x8x32xf32>
    "tpu.trace_stop"() : () -> ()
    %cst_20 = arith.constant dense<0.000000e+00> : vector<2x8x32xf32>
    %30 = vector.multi_reduction <add>, %29, %cst_20 [0] : vector<4x2x8x32xf32> to vector<2x8x32xf32>
    %31 = vector.shape_cast %30 : vector<2x8x32xf32> to vector<16x32xf32>
    %32 = vector.broadcast %1 : vector<1x32xf32> to vector<16x32xf32>
    %33 = arith.addf %31, %32 : vector<16x32xf32>
    %c0_21 = arith.constant 0 : index
    %c0_22 = arith.constant 0 : index
    %34 = vector.load %arg4[%c0_21, %c0_22] : memref<16x32xf32, #tpu.memory_space<vmem>>, vector<16x32xf32>
    %35 = arith.addf %33, %34 : vector<16x32xf32>
    %cst_23 = arith.constant dense<0.000000e+00> : vector<16xf32>
    %36 = vector.multi_reduction <add>, %35, %cst_23 [1] : vector<16x32xf32> to vector<16xf32>
    %37 = vector.shape_cast %36 : vector<16xf32> to vector<16x1xf32>
    %cst_24 = arith.constant 3.200000e+01 : f32
    %38 = vector.broadcast %cst_24 : f32 to vector<16x1xf32>
    %39 = arith.divf %37, %38 : vector<16x1xf32>
    %40 = vector.broadcast %39 : vector<16x1xf32> to vector<16x32xf32>
    %41 = arith.subf %35, %40 : vector<16x32xf32>
    %42 = arith.mulf %41, %41 : vector<16x32xf32>
    %cst_25 = arith.constant dense<0.000000e+00> : vector<16xf32>
    %43 = vector.multi_reduction <add>, %42, %cst_25 [1] : vector<16x32xf32> to vector<16xf32>
    %44 = vector.shape_cast %43 : vector<16xf32> to vector<16x1xf32>
    %cst_26 = arith.constant 3.200000e+01 : f32
    %45 = vector.broadcast %cst_26 : f32 to vector<16x1xf32>
    %46 = arith.divf %44, %45 : vector<16x1xf32>
    %47 = vector.broadcast %39 : vector<16x1xf32> to vector<16x32xf32>
    %48 = arith.subf %35, %47 : vector<16x32xf32>
    %cst_27 = arith.constant 9.99999974E-6 : f32
    %49 = vector.broadcast %cst_27 : f32 to vector<16x1xf32>
    %50 = arith.addf %46, %49 : vector<16x1xf32>
    %51 = math.rsqrt %50 : vector<16x1xf32>
    %52 = vector.broadcast %51 : vector<16x1xf32> to vector<16x32xf32>
    %53 = arith.mulf %48, %52 : vector<16x32xf32>
    %54 = vector.broadcast %2 : vector<1x32xf32> to vector<16x32xf32>
    %55 = arith.mulf %53, %54 : vector<16x32xf32>
    %56 = vector.broadcast %3 : vector<1x32xf32> to vector<16x32xf32>
    %57 = arith.addf %55, %56 : vector<16x32xf32>
    %c0_28 = arith.constant 0 : index
    %c0_29 = arith.constant 0 : index
    %58 = vector.load %arg7[%c0_28, %c0_29] : memref<32x128xf32, #tpu.memory_space<vmem>>, vector<32x128xf32>
    %cst_30 = arith.constant dense<0.000000e+00> : vector<16x128xf32>
    %59 = tpu.matmul %57, %58, %cst_30 {dimension_numbers = #tpu.dot_dimension_numbers<[1], [0], [0], [1], [0, 0, 1, 1], [], []>} : vector<16x32xf32>, vector<32x128xf32>, vector<16x128xf32> -> vector<16x128xf32>
    %c0_31 = arith.constant 0 : index
    %c0_32 = arith.constant 0 : index
    %60 = vector.load %arg8[%c0_31, %c0_32] : memref<1x128xf32, #tpu.memory_space<vmem>>, vector<1x128xf32>
    %61 = vector.broadcast %60 : vector<1x128xf32> to vector<16x128xf32>
    %62 = arith.addf %59, %61 : vector<16x128xf32>
    %cst_33 = arith.constant 0.000000e+00 : f32
    %63 = vector.broadcast %cst_33 : f32 to vector<16x128xf32>
    %64 = arith.maximumf %62, %63 : vector<16x128xf32>
    %c0_34 = arith.constant 0 : index
    %c0_35 = arith.constant 0 : index
    %65 = vector.load %arg9[%c0_34, %c0_35] : memref<128x32xf32, #tpu.memory_space<vmem>>, vector<128x32xf32>
    %cst_36 = arith.constant dense<0.000000e+00> : vector<16x32xf32>
    %66 = tpu.matmul %64, %65, %cst_36 {dimension_numbers = #tpu.dot_dimension_numbers<[1], [0], [0], [1], [0, 0, 1, 1], [], []>} : vector<16x128xf32>, vector<128x32xf32>, vector<16x32xf32> -> vector<16x32xf32>
    %67 = vector.broadcast %4 : vector<1x32xf32> to vector<16x32xf32>
    %68 = arith.addf %66, %67 : vector<16x32xf32>
    %69 = arith.addf %68, %57 : vector<16x32xf32>
    %cst_37 = arith.constant dense<0.000000e+00> : vector<16xf32>
    %70 = vector.multi_reduction <add>, %69, %cst_37 [1] : vector<16x32xf32> to vector<16xf32>
    %71 = vector.shape_cast %70 : vector<16xf32> to vector<16x1xf32>
    %cst_38 = arith.constant 3.200000e+01 : f32
    %72 = vector.broadcast %cst_38 : f32 to vector<16x1xf32>
    %73 = arith.divf %71, %72 : vector<16x1xf32>
    %74 = vector.broadcast %73 : vector<16x1xf32> to vector<16x32xf32>
    %75 = arith.subf %69, %74 : vector<16x32xf32>
    %76 = arith.mulf %75, %75 : vector<16x32xf32>
    %cst_39 = arith.constant dense<0.000000e+00> : vector<16xf32>
    %77 = vector.multi_reduction <add>, %76, %cst_39 [1] : vector<16x32xf32> to vector<16xf32>
    %78 = vector.shape_cast %77 : vector<16xf32> to vector<16x1xf32>
    %cst_40 = arith.constant 3.200000e+01 : f32
    %79 = vector.broadcast %cst_40 : f32 to vector<16x1xf32>
    %80 = arith.divf %78, %79 : vector<16x1xf32>
    %81 = vector.broadcast %73 : vector<16x1xf32> to vector<16x32xf32>
    %82 = arith.subf %69, %81 : vector<16x32xf32>
    %cst_41 = arith.constant 9.99999974E-6 : f32
    %83 = vector.broadcast %cst_41 : f32 to vector<16x1xf32>
    %84 = arith.addf %80, %83 : vector<16x1xf32>
    %85 = math.rsqrt %84 : vector<16x1xf32>
    %86 = vector.broadcast %85 : vector<16x1xf32> to vector<16x32xf32>
    %87 = arith.mulf %82, %86 : vector<16x32xf32>
    %88 = vector.broadcast %5 : vector<1x32xf32> to vector<16x32xf32>
    %89 = arith.mulf %87, %88 : vector<16x32xf32>
    %90 = vector.broadcast %6 : vector<1x32xf32> to vector<16x32xf32>
    %91 = arith.addf %89, %90 : vector<16x32xf32>
    %c0_42 = arith.constant 0 : index
    %c0_43 = arith.constant 0 : index
    %92 = vector.load %arg11[%c0_42, %c0_43] : memref<16x32xf32, #tpu.memory_space<vmem>>, vector<16x32xf32>
    tpu.vector_store %arg11[%c0_42, %c0_43], %91 {strides = array<i32>} : memref<16x32xf32, #tpu.memory_space<vmem>>, vector<16x32xf32>,
    return
  }
  func.func @transform_0(%arg0: i32) -> (i32, i32, i32) {
    %c0_i32 = arith.constant 0 : i32
    %c0_i32_0 = arith.constant 0 : i32
    %c0_i32_1 = arith.constant 0 : i32
    %c0_i32_2 = arith.constant 0 : i32
    return %c0_i32, %c0_i32_0, %c0_i32_1 : i32, i32, i32
  }
  func.func @transform_1(%arg0: i32) -> (i32, i32, i32) {
    %c0_i32 = arith.constant 0 : i32
    %c0_i32_0 = arith.constant 0 : i32
    %c0_i32_1 = arith.constant 0 : i32
    %c0_i32_2 = arith.constant 0 : i32
    return %c0_i32, %c0_i32_0, %c0_i32_1 : i32, i32, i32
  }
  func.func @transform_2(%arg0: i32) -> (i32, i32, i32) {
    %c0_i32 = arith.constant 0 : i32
    %c0_i32_0 = arith.constant 0 : i32
    %c0_i32_1 = arith.constant 0 : i32
    %c0_i32_2 = arith.constant 0 : i32
    return %c0_i32, %c0_i32_0, %c0_i32_1 : i32, i32, i32
  }
  func.func @transform_3(%arg0: i32) -> (i32, i32) {
    %c0_i32 = arith.constant 0 : i32
    %c0_i32_0 = arith.constant 0 : i32
    %c0_i32_1 = arith.constant 0 : i32
    return %c0_i32, %c0_i32_0 : i32, i32
  }
  func.func @transform_4(%arg0: i32) -> (i32, i32) {
    %c0_i32 = arith.constant 0 : i32
    %c0_i32_0 = arith.constant 0 : i32
    %c0_i32_1 = arith.constant 0 : i32
    return %c0_i32, %c0_i32_0 : i32, i32
  }
  func.func @transform_5(%arg0: i32) -> (i32, i32, i32) {
    %c0_i32 = arith.constant 0 : i32
    %c0_i32_0 = arith.constant 0 : i32
    %c0_i32_1 = arith.constant 0 : i32
    %c0_i32_2 = arith.constant 0 : i32
    return %c0_i32, %c0_i32_0, %c0_i32_1 : i32, i32, i32
  }
  func.func @transform_6(%arg0: i32) -> (i32, i32) {
    %c0_i32 = arith.constant 0 : i32
    %c0_i32_0 = arith.constant 0 : i32
    %c0_i32_1 = arith.constant 0 : i32
    return %c0_i32, %c0_i32_0 : i32, i32
  }
  func.func @transform_7(%arg0: i32) -> (i32, i32) {
    %c0_i32 = arith.constant 0 : i32
    %c0_i32_0 = arith.constant 0 : i32
    %c0_i32_1 = arith.constant 0 : i32
    return %c0_i32, %c0_i32_0 : i32, i32
  }
  func.func @transform_8(%arg0: i32) -> (i32, i32) {
    %c0_i32 = arith.constant 0 : i32
    %c0_i32_0 = arith.constant 0 : i32
    %c0_i32_1 = arith.constant 0 : i32
    return %c0_i32, %c0_i32_0 : i32, i32
  }
  func.func @transform_9(%arg0: i32) -> (i32, i32) {
    %c0_i32 = arith.constant 0 : i32
    %c0_i32_0 = arith.constant 0 : i32
    %c0_i32_1 = arith.constant 0 : i32
    return %c0_i32, %c0_i32_0 : i32, i32
  }
  func.func @transform_10(%arg0: i32) -> (i32, i32) {
    %c0_i32 = arith.constant 0 : i32
    %c0_i32_0 = arith.constant 0 : i32
    %c0_i32_1 = arith.constant 0 : i32
    return %c0_i32, %c0_i32_0 : i32, i32
  }
}

</mosaic_0001>

<llo_original>
// kernel: tpu_custom_call.1
$region0: #{tpu_custom_call.1}
  #allocation0 [shape = 'u32[]', space=smem, size = 0x4, offset = 0x4, fixed_abs, tag = 'smem constant byte address 0x4 - core index']
  #allocation1 [shape = 'u32[144,128]{1,0:T(1,128)}', space=vmem, size = 0x12000, scoped, tag = 'internal scratch']
  %s0 = inlined_call_operand.vmem [shape: f32[8,8,8], index: 0, kind: input, shape index: {}]
  %s1 = inlined_call_operand.vmem [shape: f32[8,8,8], index: 1, kind: input, shape index: {}]
  %s2 = inlined_call_operand.hbm [shape: f32[8,8,8], index: 2, kind: input, shape index: {}]
  %s3 = inlined_call_operand.hbm [shape: f32[16,32], index: 3, kind: input, shape index: {}]
  %s4 = inlined_call_operand.hbm [shape: f32[8,8], index: 4, kind: input, shape index: {}]
  %s5 = inlined_call_operand.vmem [shape: f32[4,8,32], index: 5, kind: input, shape index: {}]
  %s6 = inlined_call_operand.hbm [shape: f32[32,128], index: 6, kind: input, shape index: {}]
  %s7 = inlined_call_operand.vmem [shape: f32[1,128], index: 7, kind: input, shape index: {}]
  %s8 = inlined_call_operand.vmem [shape: f32[128,32], index: 8, kind: input, shape index: {}]
  %s9 = inlined_call_operand.vmem [shape: f32[6,32], index: 9, kind: input, shape index: {}]
  %s10 = inlined_call_operand.hbm [shape: f32[16,32], index: 10, kind: output, shape index: {}]
  %s11 = sld [smem:[#allocation0]]
  $region66: #{tpu_custom_call.1} parent=0
    _
  %s13 = ssub.s32 1, %s11
  %s14 = scalar_select 0, %s13, %s11
  $region1: #{tpu_custom_call.1} parent=0
    #allocation2 [shape = 'u8[32768]{0}', space=vmem, size = 0x8000, scoped, tag = 'input window, operand 2, single buffered']
    #allocation3 [shape = 's32[1]{0}', space=sflag, size = 0x4, scoped, tag = 'scoped memory for tpu_custom_call.1']
    #allocation4 [shape = 's32[1]{0}', space=sflag, size = 0x4, scoped, tag = 'scoped memory for tpu_custom_call.1']
    #allocation5 [shape = 'u8[8192]{0}', space=vmem, size = 0x2000, scoped, tag = 'input window, operand 3, single buffered']
    #allocation6 [shape = 's32[1]{0}', space=sflag, size = 0x4, scoped, tag = 'scoped memory for tpu_custom_call.1']
    #allocation7 [shape = 'u8[4096]{0}', space=vmem, size = 0x1000, scoped, tag = 'input window, operand 4, single buffered']
    #allocation8 [shape = 'u8[16384]{0}', space=vmem, size = 0x4000, scoped, tag = 'input window, operand 6, single buffered']
    #allocation9 [shape = 's32[1]{0}', space=sflag, size = 0x4, scoped, tag = 'scoped memory for tpu_custom_call.1']
    #allocation10 [shape = 'u8[8192]{0}', space=vmem, size = 0x2000, scoped, tag = 'output window, operand 0, single buffered']
    %15 = vsyncpa [#allocation3], 0
    %16 = vsyncpa [#allocation6], 0
    %17 = vsyncpa [#allocation9], 0
    %18 = vsyncpa [#allocation4], 0
    // Predicated region
    $region2: #{tpu_custom_call.1} parent=1 // pred_check
      _
    $region3: #{tpu_custom_call.1} parent=1 // pred_check_branch
      %20 = sbr.rel (0) target = $region5
    $region4: #{tpu_custom_call.1} parent=1 // pred_region
      _
    $region5: #{tpu_custom_call.1} parent=1 // pred_fallthru
      _
    // Predicated region
    $region6: #{tpu_custom_call.1} parent=1 // pred_check
      _
    $region7: #{tpu_custom_call.1} parent=1 // pred_check_branch
      %22 = sbr.rel (0) target = $region9
    $region8: #{tpu_custom_call.1} parent=1 // pred_region
      _
    $region9: #{tpu_custom_call.1} parent=1 // pred_fallthru
      _
    // Predicated region
    $region10: #{tpu_custom_call.1} parent=1 // pred_check
      _
    $region11: #{tpu_custom_call.1} parent=1 // pred_check_branch
      %24 = sbr.rel (0) target = $region13
    $region12: #{tpu_custom_call.1} parent=1 // pred_region
      %s26 = ssub.s32 1024, 1024
      %27 = vsyncadd [#allocation3], %s26
      %s28 = sshll.u32 [#allocation2], 4
      %s29 = int_to_ptr.vmem [resolvable:$true] %s28
      %34 = dma.hbm_to_vmem [thread:$0]  %s2, 1024, %s29, [#allocation3], 128, 128, 8
    $region13: #{tpu_custom_call.1} parent=1 // pred_fallthru
      _
    // Predicated region
    $region14: #{tpu_custom_call.1} parent=1 // pred_check
      _
    $region15: #{tpu_custom_call.1} parent=1 // pred_check_branch
      %36 = sbr.rel (0) target = $region17
    $region16: #{tpu_custom_call.1} parent=1 // pred_region
      %s38 = ssub.s32 256, 256
      %39 = vsyncadd [#allocation6], %s38
      %s40 = sshll.u32 [#allocation5], 4
      %s41 = int_to_ptr.vmem [resolvable:$true] %s40
      %46 = dma.hbm_to_vmem [thread:$0]  %s3, 256, %s41, [#allocation6], 128, 128, 8
    $region17: #{tpu_custom_call.1} parent=1 // pred_fallthru
      _
    // Predicated region
    $region18: #{tpu_custom_call.1} parent=1 // pred_check
      _
    $region19: #{tpu_custom_call.1} parent=1 // pred_check_branch
      %48 = sbr.rel (0) target = $region21
    $region20: #{tpu_custom_call.1} parent=1 // pred_region
      %s50 = ssub.s32 128, 128
      %51 = vsyncadd [#allocation6], %s50
      %s53 = sshll.u32 [#allocation7], 4
      %s54 = int_to_ptr.vmem [resolvable:$true] %s53
      %56 = dma.hbm_to_vmem [thread:$0]  %s4, 128, %s54, [#allocation6]
    $region21: #{tpu_custom_call.1} parent=1 // pred_fallthru
      _
    // Predicated region
    $region22: #{tpu_custom_call.1} parent=1 // pred_check
      _
    $region23: #{tpu_custom_call.1} parent=1 // pred_check_branch
      %58 = sbr.rel (0) target = $region25
    $region24: #{tpu_custom_call.1} parent=1 // pred_region
      _
    $region25: #{tpu_custom_call.1} parent=1 // pred_fallthru
      _
    // Predicated region
    $region26: #{tpu_custom_call.1} parent=1 // pred_check
      _
    $region27: #{tpu_custom_call.1} parent=1 // pred_check_branch
      %60 = sbr.rel (0) target = $region29
    $region28: #{tpu_custom_call.1} parent=1 // pred_region
      %s62 = ssub.s32 512, 512
      %63 = vsyncadd [#allocation9], %s62
      %s64 = sshll.u32 [#allocation8], 4
      %s65 = int_to_ptr.vmem [resolvable:$true] %s64
      %70 = dma.hbm_to_vmem [thread:$0]  %s6, 512, %s65, [#allocation9], 128, 128, 8
    $region29: #{tpu_custom_call.1} parent=1 // pred_fallthru
      _
    // Predicated region
    $region30: #{tpu_custom_call.1} parent=1 // pred_check
      _
    $region31: #{tpu_custom_call.1} parent=1 // pred_check_branch
      %72 = sbr.rel (0) target = $region33
    $region32: #{tpu_custom_call.1} parent=1 // pred_region
      _
    $region33: #{tpu_custom_call.1} parent=1 // pred_fallthru
      _
    // Predicated region
    $region34: #{tpu_custom_call.1} parent=1 // pred_check
      _
    $region35: #{tpu_custom_call.1} parent=1 // pred_check_branch
      %74 = sbr.rel (0) target = $region37
    $region36: #{tpu_custom_call.1} parent=1 // pred_region
      _
    $region37: #{tpu_custom_call.1} parent=1 // pred_fallthru
      _
    // Predicated region
    $region38: #{tpu_custom_call.1} parent=1 // pred_check
      _
    $region39: #{tpu_custom_call.1} parent=1 // pred_check_branch
      %76 = sbr.rel (0) target = $region41
    $region40: #{tpu_custom_call.1} parent=1 // pred_region
      _
    $region41: #{tpu_custom_call.1} parent=1 // pred_fallthru
      _
    // Predicated region
    $region42: #{tpu_custom_call.1} parent=1 // pred_check
      _
    $region43: #{tpu_custom_call.1} parent=1 // pred_check_branch
      %78 = sbr.rel (0) target = $region45
    $region44: #{tpu_custom_call.1} parent=1 // pred_region
      %79 = dma.done [#allocation3], 1024
    $region45: #{tpu_custom_call.1} parent=1 // pred_fallthru
      _
    // Predicated region
    $region46: #{tpu_custom_call.1} parent=1 // pred_check
      _
    $region47: #{tpu_custom_call.1} parent=1 // pred_check_branch
      %81 = sbr.rel (0) target = $region49
    $region48: #{tpu_custom_call.1} parent=1 // pred_region
      %82 = dma.done [#allocation6], 256
    $region49: #{tpu_custom_call.1} parent=1 // pred_fallthru
      _
    // Predicated region
    $region50: #{tpu_custom_call.1} parent=1 // pred_check
      _
    $region51: #{tpu_custom_call.1} parent=1 // pred_check_branch
      %84 = sbr.rel (0) target = $region53
    $region52: #{tpu_custom_call.1} parent=1 // pred_region
      %85 = dma.done [#allocation6], 128
    $region53: #{tpu_custom_call.1} parent=1 // pred_fallthru
      _
    // Predicated region
    $region54: #{tpu_custom_call.1} parent=1 // pred_check
      _
    $region55: #{tpu_custom_call.1} parent=1 // pred_check_branch
      %87 = sbr.rel (0) target = $region57
    $region56: #{tpu_custom_call.1} parent=1 // pred_region
      %88 = dma.done [#allocation9], 512
    $region57: #{tpu_custom_call.1} parent=1 // pred_fallthru
      _
    %v89 = vld [vmem:[%s9] sm:$0x3f]
    %v90 = vld [vmem:[%s0] sm:$0xff]
    %v91 = vld [vmem:[%s0 + $0x8] sm:$0xff]
    %v92 = vld [vmem:[%s0 + $0x10] sm:$0xff]
    %v93 = vld [vmem:[%s0 + $0x18] sm:$0xff]
    %v94 = vld [vmem:[%s0 + $0x20] sm:$0xff]
    %v95 = vld [vmem:[%s0 + $0x28] sm:$0xff]
    %v96 = vld [vmem:[%s0 + $0x30] sm:$0xff]
    %v97 = vld [vmem:[%s0 + $0x38] sm:$0xff]
    %v98 = vmul.f32 %v90, 0.17677669
    %v99 = vmul.f32 %v91, 0.17677669
    %v100 = vmul.f32 %v92, 0.17677669
    %v101 = vmul.f32 %v93, 0.17677669
    %v102 = vmul.f32 %v94, 0.17677669
    %v103 = vmul.f32 %v95, 0.17677669
    %v104 = vmul.f32 %v96, 0.17677669
    %v105 = vmul.f32 %v97, 0.17677669
    %v106 = vld [vmem:[%s1] sm:$0xff]
    %v107 = vld [vmem:[%s1 + $0x8] sm:$0xff]
    %v108 = vld [vmem:[%s1 + $0x10] sm:$0xff]
    %v109 = vld [vmem:[%s1 + $0x18] sm:$0xff]
    %v110 = vld [vmem:[%s1 + $0x20] sm:$0xff]
    %v111 = vld [vmem:[%s1 + $0x28] sm:$0xff]
    %v112 = vld [vmem:[%s1 + $0x30] sm:$0xff]
    %v113 = vld [vmem:[%s1 + $0x38] sm:$0xff]
    %v114 = vld [vmem:[#allocation7] sm:$0xff]
    %vm115 = vcmask 64512
    %v117 = vsel %vm115, %v98, 0
    %119 = vmatprep.subr.mxu0 0.0
    %120 = vmatpush1.msra.mxu0 0.0
    %121 = vmatprep.subr.mxu0 0.0
    %122 = vmatpush1.msra.mxu0 0.0
    %123 = vmatprep.subr.mxu0 0.0
    %124 = vmatpush1.msra.mxu0 0.0
    %125 = vmatprep.subr.mxu0 0.0
    %126 = vmatpush1.msra.mxu0 0.0
    %127 = vmatprep.subr.mxu0 0.0
    %128 = vmatpush1.msra.mxu0 0.0
    %129 = vmatprep.subr.mxu0 0.0
    %130 = vmatpush1.msra.mxu0 0.0
    %131 = vmatprep.subr.mxu0 0.0
    %132 = vmatpush1.msra.mxu0 0.0
    %133 = vmatprep.subr.mxu0 0.0
    %134 = vmatpush1.msra.mxu0 0.0
    %135 = vmatprep.subr.mxu0 0.0
    %136 = vmatpush1.msra.mxu0 0.0
    %137 = vmatprep.subr.mxu0 0.0
    %138 = vmatpush1.msra.mxu0 0.0
    %139 = vmatprep.subr.mxu0 0.0
    %140 = vmatpush1.msra.mxu0 0.0
    %141 = vmatprep.subr.mxu0 0.0
    %142 = vmatpush1.msra.mxu0 0.0
    %143 = vmatprep.subr.mxu0 0.0
    %144 = vmatpush1.msra.mxu0 0.0
    %145 = vmatprep.subr.mxu0 0.0
    %146 = vmatpush1.msra.mxu0 0.0
    %147 = vmatprep.subr.mxu0 0.0
    %148 = vmatpush1.msra.mxu0 0.0
    %149 = vmatprep.subr.mxu0 0.0
    %150 = vmatpush1.msra.mxu0 %v106
    %151 = vmatprep.subr.mxu0 0.0
    %152 = vmatpush2.msra.mxu0 0.0
    %153 = vmatprep.subr.mxu0 0.0
    %154 = vmatpush2.msra.mxu0 0.0
    %155 = vmatprep.subr.mxu0 0.0
    %156 = vmatpush2.msra.mxu0 0.0
    %157 = vmatprep.subr.mxu0 0.0
    %158 = vmatpush2.msra.mxu0 0.0
    %159 = vmatprep.subr.mxu0 0.0
    %160 = vmatpush2.msra.mxu0 0.0
    %161 = vmatprep.subr.mxu0 0.0
    %162 = vmatpush2.msra.mxu0 0.0
    %163 = vmatprep.subr.mxu0 0.0
    %164 = vmatpush2.msra.mxu0 0.0
    %165 = vmatprep.subr.mxu0 0.0
    %166 = vmatpush2.msra.mxu0 0.0
    %167 = vmatprep.subr.mxu0 0.0
    %168 = vmatpush2.msra.mxu0 0.0
    %169 = vmatprep.subr.mxu0 0.0
    %170 = vmatpush2.msra.mxu0 0.0
    %171 = vmatprep.subr.mxu0 0.0
    %172 = vmatpush2.msra.mxu0 0.0
    %173 = vmatprep.subr.mxu0 0.0
    %174 = vmatpush2.msra.mxu0 0.0
    %175 = vmatprep.subr.mxu0 0.0
    %176 = vmatpush2.msra.mxu0 0.0
    %177 = vmatprep.subr.mxu0 0.0
    %178 = vmatpush2.msra.mxu0 0.0
    %179 = vmatprep.subr.mxu0 0.0
    %180 = vmatpush2.msra.mxu0 0.0
    %181 = vmatprep.subr.mxu0 0.0
    %182 = vmatpush2.msra.mxu0 0.0
    %183 = vmatprep.mubr.f32.mxu0 0.0
    %184 = vmatmul.mubr.f32.gmra.mxu0 %v117
    %v185 = vpop.f32.mrf.mxu0
    %v186 = vadd.f32 %v114, %v185
    %v187 = vpop.f32.mrf.mxu0
    %188 = vdwg.mxu0
    %v190 = vsel %vm115, %v99, 0
    %192 = vmatprep.subr.mxu0 0.0
    %193 = vmatpush1.msra.mxu0 0.0
    %194 = vmatprep.subr.mxu0 0.0
    %195 = vmatpush1.msra.mxu0 0.0
    %196 = vmatprep.subr.mxu0 0.0
    %197 = vmatpush1.msra.mxu0 0.0
    %198 = vmatprep.subr.mxu0 0.0
    %199 = vmatpush1.msra.mxu0 0.0
    %200 = vmatprep.subr.mxu0 0.0
    %201 = vmatpush1.msra.mxu0 0.0
    %202 = vmatprep.subr.mxu0 0.0
    %203 = vmatpush1.msra.mxu0 0.0
    %204 = vmatprep.subr.mxu0 0.0
    %205 = vmatpush1.msra.mxu0 0.0
    %206 = vmatprep.subr.mxu0 0.0
    %207 = vmatpush1.msra.mxu0 0.0
    %208 = vmatprep.subr.mxu0 0.0
    %209 = vmatpush1.msra.mxu0 0.0
    %210 = vmatprep.subr.mxu0 0.0
    %211 = vmatpush1.msra.mxu0 0.0
    %212 = vmatprep.subr.mxu0 0.0
    %213 = vmatpush1.msra.mxu0 0.0
    %214 = vmatprep.subr.mxu0 0.0
    %215 = vmatpush1.msra.mxu0 0.0
    %216 = vmatprep.subr.mxu0 0.0
    %217 = vmatpush1.msra.mxu0 0.0
    %218 = vmatprep.subr.mxu0 0.0
    %219 = vmatpush1.msra.mxu0 0.0
    %220 = vmatprep.subr.mxu0 0.0
    %221 = vmatpush1.msra.mxu0 0.0
    %222 = vmatprep.subr.mxu0 0.0
    %223 = vmatpush1.msra.mxu0 %v107
    %224 = vmatprep.subr.mxu0 0.0
    %225 = vmatpush2.msra.mxu0 0.0
    %226 = vmatprep.subr.mxu0 0.0
    %227 = vmatpush2.msra.mxu0 0.0
    %228 = vmatprep.subr.mxu0 0.0
    %229 = vmatpush2.msra.mxu0 0.0
    %230 = vmatprep.subr.mxu0 0.0
    %231 = vmatpush2.msra.mxu0 0.0
    %232 = vmatprep.subr.mxu0 0.0
    %233 = vmatpush2.msra.mxu0 0.0
    %234 = vmatprep.subr.mxu0 0.0
    %235 = vmatpush2.msra.mxu0 0.0
    %236 = vmatprep.subr.mxu0 0.0
    %237 = vmatpush2.msra.mxu0 0.0
    %238 = vmatprep.subr.mxu0 0.0
    %239 = vmatpush2.msra.mxu0 0.0
    %240 = vmatprep.subr.mxu0 0.0
    %241 = vmatpush2.msra.mxu0 0.0
    %242 = vmatprep.subr.mxu0 0.0
    %243 = vmatpush2.msra.mxu0 0.0
    %244 = vmatprep.subr.mxu0 0.0
    %245 = vmatpush2.msra.mxu0 0.0
    %246 = vmatprep.subr.mxu0 0.0
    %247 = vmatpush2.msra.mxu0 0.0
    %248 = vmatprep.subr.mxu0 0.0
    %249 = vmatpush2.msra.mxu0 0.0
    %250 = vmatprep.subr.mxu0 0.0
    %251 = vmatpush2.msra.mxu0 0.0
    %252 = vmatprep.subr.mxu0 0.0
    %253 = vmatpush2.msra.mxu0 0.0
    %254 = vmatprep.subr.mxu0 0.0
    %255 = vmatpush2.msra.mxu0 0.0
    %256 = vmatprep.mubr.f32.mxu0 0.0
    %257 = vmatmul.mubr.f32.gmra.mxu0 %v190
    %v258 = vpop.f32.mrf.mxu0
    %v259 = vadd.f32 %v114, %v258
    %v260 = vpop.f32.mrf.mxu0
    %261 = vdwg.mxu0
    %v263 = vsel %vm115, %v100, 0
    %265 = vmatprep.subr.mxu0 0.0
    %266 = vmatpush1.msra.mxu0 0.0
    %267 = vmatprep.subr.mxu0 0.0
    %268 = vmatpush1.msra.mxu0 0.0
    %269 = vmatprep.subr.mxu0 0.0
    %270 = vmatpush1.msra.mxu0 0.0
    %271 = vmatprep.subr.mxu0 0.0
    %272 = vmatpush1.msra.mxu0 0.0
    %273 = vmatprep.subr.mxu0 0.0
    %274 = vmatpush1.msra.mxu0 0.0
    %275 = vmatprep.subr.mxu0 0.0
    %276 = vmatpush1.msra.mxu0 0.0
    %277 = vmatprep.subr.mxu0 0.0
    %278 = vmatpush1.msra.mxu0 0.0
    %279 = vmatprep.subr.mxu0 0.0
    %280 = vmatpush1.msra.mxu0 0.0
    %281 = vmatprep.subr.mxu0 0.0
    %282 = vmatpush1.msra.mxu0 0.0
    %283 = vmatprep.subr.mxu0 0.0
    %284 = vmatpush1.msra.mxu0 0.0
    %285 = vmatprep.subr.mxu0 0.0
    %286 = vmatpush1.msra.mxu0 0.0
    %287 = vmatprep.subr.mxu0 0.0
    %288 = vmatpush1.msra.mxu0 0.0
    %289 = vmatprep.subr.mxu0 0.0
    %290 = vmatpush1.msra.mxu0 0.0
    %291 = vmatprep.subr.mxu0 0.0
    %292 = vmatpush1.msra.mxu0 0.0
    %293 = vmatprep.subr.mxu0 0.0
    %294 = vmatpush1.msra.mxu0 0.0
    %295 = vmatprep.subr.mxu0 0.0
    %296 = vmatpush1.msra.mxu0 %v108
    %297 = vmatprep.subr.mxu0 0.0
    %298 = vmatpush2.msra.mxu0 0.0
    %299 = vmatprep.subr.mxu0 0.0
    %300 = vmatpush2.msra.mxu0 0.0
    %301 = vmatprep.subr.mxu0 0.0
    %302 = vmatpush2.msra.mxu0 0.0
    %303 = vmatprep.subr.mxu0 0.0
    %304 = vmatpush2.msra.mxu0 0.0
    %305 = vmatprep.subr.mxu0 0.0
    %306 = vmatpush2.msra.mxu0 0.0
    %307 = vmatprep.subr.mxu0 0.0
    %308 = vmatpush2.msra.mxu0 0.0
    %309 = vmatprep.subr.mxu0 0.0
    %310 = vmatpush2.msra.mxu0 0.0
    %311 = vmatprep.subr.mxu0 0.0
    %312 = vmatpush2.msra.mxu0 0.0
    %313 = vmatprep.subr.mxu0 0.0
    %314 = vmatpush2.msra.mxu0 0.0
    %315 = vmatprep.subr.mxu0 0.0
    %316 = vmatpush2.msra.mxu0 0.0
    %317 = vmatprep.subr.mxu0 0.0
    %318 = vmatpush2.msra.mxu0 0.0
    %319 = vmatprep.subr.mxu0 0.0
    %320 = vmatpush2.msra.mxu0 0.0
    %321 = vmatprep.subr.mxu0 0.0
    %322 = vmatpush2.msra.mxu0 0.0
    %323 = vmatprep.subr.mxu0 0.0
    %324 = vmatpush2.msra.mxu0 0.0
    %325 = vmatprep.subr.mxu0 0.0
    %326 = vmatpush2.msra.mxu0 0.0
    %327 = vmatprep.subr.mxu0 0.0
    %328 = vmatpush2.msra.mxu0 0.0
    %329 = vmatprep.mubr.f32.mxu0 0.0
    %330 = vmatmul.mubr.f32.gmra.mxu0 %v263
    %v331 = vpop.f32.mrf.mxu0
    %v332 = vadd.f32 %v114, %v331
    %v333 = vpop.f32.mrf.mxu0
    %334 = vdwg.mxu0
    %v336 = vsel %vm115, %v101, 0
    %338 = vmatprep.subr.mxu0 0.0
    %339 = vmatpush1.msra.mxu0 0.0
    %340 = vmatprep.subr.mxu0 0.0
    %341 = vmatpush1.msra.mxu0 0.0
    %342 = vmatprep.subr.mxu0 0.0
    %343 = vmatpush1.msra.mxu0 0.0
    %344 = vmatprep.subr.mxu0 0.0
    %345 = vmatpush1.msra.mxu0 0.0
    %346 = vmatprep.subr.mxu0 0.0
    %347 = vmatpush1.msra.mxu0 0.0
    %348 = vmatprep.subr.mxu0 0.0
    %349 = vmatpush1.msra.mxu0 0.0
    %350 = vmatprep.subr.mxu0 0.0
    %351 = vmatpush1.msra.mxu0 0.0
    %352 = vmatprep.subr.mxu0 0.0
    %353 = vmatpush1.msra.mxu0 0.0
    %354 = vmatprep.subr.mxu0 0.0
    %355 = vmatpush1.msra.mxu0 0.0
    %356 = vmatprep.subr.mxu0 0.0
    %357 = vmatpush1.msra.mxu0 0.0
    %358 = vmatprep.subr.mxu0 0.0
    %359 = vmatpush1.msra.mxu0 0.0
    %360 = vmatprep.subr.mxu0 0.0
    %361 = vmatpush1.msra.mxu0 0.0
    %362 = vmatprep.subr.mxu0 0.0
    %363 = vmatpush1.msra.mxu0 0.0
    %364 = vmatprep.subr.mxu0 0.0
    %365 = vmatpush1.msra.mxu0 0.0
    %366 = vmatprep.subr.mxu0 0.0
    %367 = vmatpush1.msra.mxu0 0.0
    %368 = vmatprep.subr.mxu0 0.0
    %369 = vmatpush1.msra.mxu0 %v109
    %370 = vmatprep.subr.mxu0 0.0
    %371 = vmatpush2.msra.mxu0 0.0
    %372 = vmatprep.subr.mxu0 0.0
    %373 = vmatpush2.msra.mxu0 0.0
    %374 = vmatprep.subr.mxu0 0.0
    %375 = vmatpush2.msra.mxu0 0.0
    %376 = vmatprep.subr.mxu0 0.0
    %377 = vmatpush2.msra.mxu0 0.0
    %378 = vmatprep.subr.mxu0 0.0
    %379 = vmatpush2.msra.mxu0 0.0
    %380 = vmatprep.subr.mxu0 0.0
    %381 = vmatpush2.msra.mxu0 0.0
    %382 = vmatprep.subr.mxu0 0.0
    %383 = vmatpush2.msra.mxu0 0.0
    %384 = vmatprep.subr.mxu0 0.0
    %385 = vmatpush2.msra.mxu0 0.0
    %386 = vmatprep.subr.mxu0 0.0
    %387 = vmatpush2.msra.mxu0 0.0
    %388 = vmatprep.subr.mxu0 0.0
    %389 = vmatpush2.msra.mxu0 0.0
    %390 = vmatprep.subr.mxu0 0.0
    %391 = vmatpush2.msra.mxu0 0.0
    %392 = vmatprep.subr.mxu0 0.0
    %393 = vmatpush2.msra.mxu0 0.0
    %394 = vmatprep.subr.mxu0 0.0
    %395 = vmatpush2.msra.mxu0 0.0
    %396 = vmatprep.subr.mxu0 0.0
    %397 = vmatpush2.msra.mxu0 0.0
    %398 = vmatprep.subr.mxu0 0.0
    %399 = vmatpush2.msra.mxu0 0.0
    %400 = vmatprep.subr.mxu0 0.0
    %401 = vmatpush2.msra.mxu0 0.0
    %402 = vmatprep.mubr.f32.mxu0 0.0
    %403 = vmatmul.mubr.f32.gmra.mxu0 %v336
    %v404 = vpop.f32.mrf.mxu0
    %v405 = vadd.f32 %v114, %v404
    %v406 = vpop.f32.mrf.mxu0
    %407 = vdwg.mxu0
    %v409 = vsel %vm115, %v102, 0
    %411 = vmatprep.subr.mxu0 0.0
    %412 = vmatpush1.msra.mxu0 0.0
    %413 = vmatprep.subr.mxu0 0.0
    %414 = vmatpush1.msra.mxu0 0.0
    %415 = vmatprep.subr.mxu0 0.0
    %416 = vmatpush1.msra.mxu0 0.0
    %417 = vmatprep.subr.mxu0 0.0
    %418 = vmatpush1.msra.mxu0 0.0
    %419 = vmatprep.subr.mxu0 0.0
    %420 = vmatpush1.msra.mxu0 0.0
    %421 = vmatprep.subr.mxu0 0.0
    %422 = vmatpush1.msra.mxu0 0.0
    %423 = vmatprep.subr.mxu0 0.0
    %424 = vmatpush1.msra.mxu0 0.0
    %425 = vmatprep.subr.mxu0 0.0
    %426 = vmatpush1.msra.mxu0 0.0
    %427 = vmatprep.subr.mxu0 0.0
    %428 = vmatpush1.msra.mxu0 0.0
    %429 = vmatprep.subr.mxu0 0.0
    %430 = vmatpush1.msra.mxu0 0.0
    %431 = vmatprep.subr.mxu0 0.0
    %432 = vmatpush1.msra.mxu0 0.0
    %433 = vmatprep.subr.mxu0 0.0
    %434 = vmatpush1.msra.mxu0 0.0
    %435 = vmatprep.subr.mxu0 0.0
    %436 = vmatpush1.msra.mxu0 0.0
    %437 = vmatprep.subr.mxu0 0.0
    %438 = vmatpush1.msra.mxu0 0.0
    %439 = vmatprep.subr.mxu0 0.0
    %440 = vmatpush1.msra.mxu0 0.0
    %441 = vmatprep.subr.mxu0 0.0
    %442 = vmatpush1.msra.mxu0 %v110
    %443 = vmatprep.subr.mxu0 0.0
    %444 = vmatpush2.msra.mxu0 0.0
    %445 = vmatprep.subr.mxu0 0.0
    %446 = vmatpush2.msra.mxu0 0.0
    %447 = vmatprep.subr.mxu0 0.0
    %448 = vmatpush2.msra.mxu0 0.0
    %449 = vmatprep.subr.mxu0 0.0
    %450 = vmatpush2.msra.mxu0 0.0
    %451 = vmatprep.subr.mxu0 0.0
    %452 = vmatpush2.msra.mxu0 0.0
    %453 = vmatprep.subr.mxu0 0.0
    %454 = vmatpush2.msra.mxu0 0.0
    %455 = vmatprep.subr.mxu0 0.0
    %456 = vmatpush2.msra.mxu0 0.0
    %457 = vmatprep.subr.mxu0 0.0
    %458 = vmatpush2.msra.mxu0 0.0
    %459 = vmatprep.subr.mxu0 0.0
    %460 = vmatpush2.msra.mxu0 0.0
    %461 = vmatprep.subr.mxu0 0.0
    %462 = vmatpush2.msra.mxu0 0.0
    %463 = vmatprep.subr.mxu0 0.0
    %464 = vmatpush2.msra.mxu0 0.0
    %465 = vmatprep.subr.mxu0 0.0
    %466 = vmatpush2.msra.mxu0 0.0
    %467 = vmatprep.subr.mxu0 0.0
    %468 = vmatpush2.msra.mxu0 0.0
    %469 = vmatprep.subr.mxu0 0.0
    %470 = vmatpush2.msra.mxu0 0.0
    %471 = vmatprep.subr.mxu0 0.0
    %472 = vmatpush2.msra.mxu0 0.0
    %473 = vmatprep.subr.mxu0 0.0
    %474 = vmatpush2.msra.mxu0 0.0
    %475 = vmatprep.mubr.f32.mxu0 0.0
    %476 = vmatmul.mubr.f32.gmra.mxu0 %v409
    %v477 = vpop.f32.mrf.mxu0
    %v478 = vadd.f32 %v114, %v477
    %v479 = vpop.f32.mrf.mxu0
    %480 = vdwg.mxu0
    %v482 = vsel %vm115, %v103, 0
    %484 = vmatprep.subr.mxu0 0.0
    %485 = vmatpush1.msra.mxu0 0.0
    %486 = vmatprep.subr.mxu0 0.0
    %487 = vmatpush1.msra.mxu0 0.0
    %488 = vmatprep.subr.mxu0 0.0
    %489 = vmatpush1.msra.mxu0 0.0
    %490 = vmatprep.subr.mxu0 0.0
    %491 = vmatpush1.msra.mxu0 0.0
    %492 = vmatprep.subr.mxu0 0.0
    %493 = vmatpush1.msra.mxu0 0.0
    %494 = vmatprep.subr.mxu0 0.0
    %495 = vmatpush1.msra.mxu0 0.0
    %496 = vmatprep.subr.mxu0 0.0
    %497 = vmatpush1.msra.mxu0 0.0
    %498 = vmatprep.subr.mxu0 0.0
    %499 = vmatpush1.msra.mxu0 0.0
    %500 = vmatprep.subr.mxu0 0.0
    %501 = vmatpush1.msra.mxu0 0.0
    %502 = vmatprep.subr.mxu0 0.0
    %503 = vmatpush1.msra.mxu0 0.0
    %504 = vmatprep.subr.mxu0 0.0
    %505 = vmatpush1.msra.mxu0 0.0
    %506 = vmatprep.subr.mxu0 0.0
    %507 = vmatpush1.msra.mxu0 0.0
    %508 = vmatprep.subr.mxu0 0.0
    %509 = vmatpush1.msra.mxu0 0.0
    %510 = vmatprep.subr.mxu0 0.0
    %511 = vmatpush1.msra.mxu0 0.0
    %512 = vmatprep.subr.mxu0 0.0
    %513 = vmatpush1.msra.mxu0 0.0
    %514 = vmatprep.subr.mxu0 0.0
    %515 = vmatpush1.msra.mxu0 %v111
    %516 = vmatprep.subr.mxu0 0.0
    %517 = vmatpush2.msra.mxu0 0.0
    %518 = vmatprep.subr.mxu0 0.0
    %519 = vmatpush2.msra.mxu0 0.0
    %520 = vmatprep.subr.mxu0 0.0
    %521 = vmatpush2.msra.mxu0 0.0
    %522 = vmatprep.subr.mxu0 0.0
    %523 = vmatpush2.msra.mxu0 0.0
    %524 = vmatprep.subr.mxu0 0.0
    %525 = vmatpush2.msra.mxu0 0.0
    %526 = vmatprep.subr.mxu0 0.0
    %527 = vmatpush2.msra.mxu0 0.0
    %528 = vmatprep.subr.mxu0 0.0
    %529 = vmatpush2.msra.mxu0 0.0
    %530 = vmatprep.subr.mxu0 0.0
    %531 = vmatpush2.msra.mxu0 0.0
    %532 = vmatprep.subr.mxu0 0.0
    %533 = vmatpush2.msra.mxu0 0.0
    %534 = vmatprep.subr.mxu0 0.0
    %535 = vmatpush2.msra.mxu0 0.0
    %536 = vmatprep.subr.mxu0 0.0
    %537 = vmatpush2.msra.mxu0 0.0
    %538 = vmatprep.subr.mxu0 0.0
    %539 = vmatpush2.msra.mxu0 0.0
    %540 = vmatprep.subr.mxu0 0.0
    %541 = vmatpush2.msra.mxu0 0.0
    %542 = vmatprep.subr.mxu0 0.0
    %543 = vmatpush2.msra.mxu0 0.0
    %544 = vmatprep.subr.mxu0 0.0
    %545 = vmatpush2.msra.mxu0 0.0
    %546 = vmatprep.subr.mxu0 0.0
    %547 = vmatpush2.msra.mxu0 0.0
    %548 = vmatprep.mubr.f32.mxu0 0.0
    %549 = vmatmul.mubr.f32.gmra.mxu0 %v482
    %v550 = vpop.f32.mrf.mxu0
    %v551 = vadd.f32 %v114, %v550
    %v552 = vpop.f32.mrf.mxu0
    %553 = vdwg.mxu0
    %v555 = vsel %vm115, %v104, 0
    %557 = vmatprep.subr.mxu0 0.0
    %558 = vmatpush1.msra.mxu0 0.0
    %559 = vmatprep.subr.mxu0 0.0
    %560 = vmatpush1.msra.mxu0 0.0
    %561 = vmatprep.subr.mxu0 0.0
    %562 = vmatpush1.msra.mxu0 0.0
    %563 = vmatprep.subr.mxu0 0.0
    %564 = vmatpush1.msra.mxu0 0.0
    %565 = vmatprep.subr.mxu0 0.0
    %566 = vmatpush1.msra.mxu0 0.0
    %567 = vmatprep.subr.mxu0 0.0
    %568 = vmatpush1.msra.mxu0 0.0
    %569 = vmatprep.subr.mxu0 0.0
    %570 = vmatpush1.msra.mxu0 0.0
    %571 = vmatprep.subr.mxu0 0.0
    %572 = vmatpush1.msra.mxu0 0.0
    %573 = vmatprep.subr.mxu0 0.0
    %574 = vmatpush1.msra.mxu0 0.0
    %575 = vmatprep.subr.mxu0 0.0
    %576 = vmatpush1.msra.mxu0 0.0
    %577 = vmatprep.subr.mxu0 0.0
    %578 = vmatpush1.msra.mxu0 0.0
    %579 = vmatprep.subr.mxu0 0.0
    %580 = vmatpush1.msra.mxu0 0.0
    %581 = vmatprep.subr.mxu0 0.0
    %582 = vmatpush1.msra.mxu0 0.0
    %583 = vmatprep.subr.mxu0 0.0
    %584 = vmatpush1.msra.mxu0 0.0
    %585 = vmatprep.subr.mxu0 0.0
    %586 = vmatpush1.msra.mxu0 0.0
    %587 = vmatprep.subr.mxu0 0.0
    %588 = vmatpush1.msra.mxu0 %v112
    %589 = vmatprep.subr.mxu0 0.0
    %590 = vmatpush2.msra.mxu0 0.0
    %591 = vmatprep.subr.mxu0 0.0
    %592 = vmatpush2.msra.mxu0 0.0
    %593 = vmatprep.subr.mxu0 0.0
    %594 = vmatpush2.msra.mxu0 0.0
    %595 = vmatprep.subr.mxu0 0.0
    %596 = vmatpush2.msra.mxu0 0.0
    %597 = vmatprep.subr.mxu0 0.0
    %598 = vmatpush2.msra.mxu0 0.0
    %599 = vmatprep.subr.mxu0 0.0
    %600 = vmatpush2.msra.mxu0 0.0
    %601 = vmatprep.subr.mxu0 0.0
    %602 = vmatpush2.msra.mxu0 0.0
    %603 = vmatprep.subr.mxu0 0.0
    %604 = vmatpush2.msra.mxu0 0.0
    %605 = vmatprep.subr.mxu0 0.0
    %606 = vmatpush2.msra.mxu0 0.0
    %607 = vmatprep.subr.mxu0 0.0
    %608 = vmatpush2.msra.mxu0 0.0
    %609 = vmatprep.subr.mxu0 0.0
    %610 = vmatpush2.msra.mxu0 0.0
    %611 = vmatprep.subr.mxu0 0.0
    %612 = vmatpush2.msra.mxu0 0.0
    %613 = vmatprep.subr.mxu0 0.0
    %614 = vmatpush2.msra.mxu0 0.0
    %615 = vmatprep.subr.mxu0 0.0
    %616 = vmatpush2.msra.mxu0 0.0
    %617 = vmatprep.subr.mxu0 0.0
    %618 = vmatpush2.msra.mxu0 0.0
    %619 = vmatprep.subr.mxu0 0.0
    %620 = vmatpush2.msra.mxu0 0.0
    %621 = vmatprep.mubr.f32.mxu0 0.0
    %622 = vmatmul.mubr.f32.gmra.mxu0 %v555
    %v623 = vpop.f32.mrf.mxu0
    %v624 = vadd.f32 %v114, %v623
    %v625 = vpop.f32.mrf.mxu0
    %626 = vdwg.mxu0
    %v628 = vsel %vm115, %v105, 0
    %630 = vmatprep.subr.mxu0 0.0
    %631 = vmatpush1.msra.mxu0 0.0
    %632 = vmatprep.subr.mxu0 0.0
    %633 = vmatpush1.msra.mxu0 0.0
    %634 = vmatprep.subr.mxu0 0.0
    %635 = vmatpush1.msra.mxu0 0.0
    %636 = vmatprep.subr.mxu0 0.0
    %637 = vmatpush1.msra.mxu0 0.0
    %638 = vmatprep.subr.mxu0 0.0
    %639 = vmatpush1.msra.mxu0 0.0
    %640 = vmatprep.subr.mxu0 0.0
    %641 = vmatpush1.msra.mxu0 0.0
    %642 = vmatprep.subr.mxu0 0.0
    %643 = vmatpush1.msra.mxu0 0.0
    %644 = vmatprep.subr.mxu0 0.0
    %645 = vmatpush1.msra.mxu0 0.0
    %646 = vmatprep.subr.mxu0 0.0
    %647 = vmatpush1.msra.mxu0 0.0
    %648 = vmatprep.subr.mxu0 0.0
    %649 = vmatpush1.msra.mxu0 0.0
    %650 = vmatprep.subr.mxu0 0.0
    %651 = vmatpush1.msra.mxu0 0.0
    %652 = vmatprep.subr.mxu0 0.0
    %653 = vmatpush1.msra.mxu0 0.0
    %654 = vmatprep.subr.mxu0 0.0
    %655 = vmatpush1.msra.mxu0 0.0
    %656 = vmatprep.subr.mxu0 0.0
    %657 = vmatpush1.msra.mxu0 0.0
    %658 = vmatprep.subr.mxu0 0.0
    %659 = vmatpush1.msra.mxu0 0.0
    %660 = vmatprep.subr.mxu0 0.0
    %661 = vmatpush1.msra.mxu0 %v113
    %662 = vmatprep.subr.mxu0 0.0
    %663 = vmatpush2.msra.mxu0 0.0
    %664 = vmatprep.subr.mxu0 0.0
    %665 = vmatpush2.msra.mxu0 0.0
    %666 = vmatprep.subr.mxu0 0.0
    %667 = vmatpush2.msra.mxu0 0.0
    %668 = vmatprep.subr.mxu0 0.0
    %669 = vmatpush2.msra.mxu0 0.0
    %670 = vmatprep.subr.mxu0 0.0
    %671 = vmatpush2.msra.mxu0 0.0
    %672 = vmatprep.subr.mxu0 0.0
    %673 = vmatpush2.msra.mxu0 0.0
    %674 = vmatprep.subr.mxu0 0.0
    %675 = vmatpush2.msra.mxu0 0.0
    %676 = vmatprep.subr.mxu0 0.0
    %677 = vmatpush2.msra.mxu0 0.0
    %678 = vmatprep.subr.mxu0 0.0
    %679 = vmatpush2.msra.mxu0 0.0
    %680 = vmatprep.subr.mxu0 0.0
    %681 = vmatpush2.msra.mxu0 0.0
    %682 = vmatprep.subr.mxu0 0.0
    %683 = vmatpush2.msra.mxu0 0.0
    %684 = vmatprep.subr.mxu0 0.0
    %685 = vmatpush2.msra.mxu0 0.0
    %686 = vmatprep.subr.mxu0 0.0
    %687 = vmatpush2.msra.mxu0 0.0
    %688 = vmatprep.subr.mxu0 0.0
    %689 = vmatpush2.msra.mxu0 0.0
    %690 = vmatprep.subr.mxu0 0.0
    %691 = vmatpush2.msra.mxu0 0.0
    %692 = vmatprep.subr.mxu0 0.0
    %693 = vmatpush2.msra.mxu0 0.0
    %694 = vmatprep.mubr.f32.mxu0 0.0
    %695 = vmatmul.mubr.f32.gmra.mxu0 %v628
    %v696 = vpop.f32.mrf.mxu0
    %v697 = vadd.f32 %v114, %v696
    %v698 = vpop.f32.mrf.mxu0
    %699 = vdwg.mxu0
    %v700 = vsel %vm115, %v186, -inf
    %701 = vmax.xlane.f32.xlu0 %v700
    %v702 = vpop.xlane.xlu0 %701
    %v703 = vsel %vm115, %v259, -inf
    %704 = vmax.xlane.f32.xlu0 %v703
    %v705 = vpop.xlane.xlu0 %704
    %v706 = vsel %vm115, %v332, -inf
    %707 = vmax.xlane.f32.xlu0 %v706
    %v708 = vpop.xlane.xlu0 %707
    %v709 = vsel %vm115, %v405, -inf
    %710 = vmax.xlane.f32.xlu0 %v709
    %v711 = vpop.xlane.xlu0 %710
    %v712 = vsel %vm115, %v478, -inf
    %713 = vmax.xlane.f32.xlu0 %v712
    %v714 = vpop.xlane.xlu0 %713
    %v715 = vsel %vm115, %v551, -inf
    %716 = vmax.xlane.f32.xlu0 %v715
    %v717 = vpop.xlane.xlu0 %716
    %v718 = vsel %vm115, %v624, -inf
    %719 = vmax.xlane.f32.xlu0 %v718
    %v720 = vpop.xlane.xlu0 %719
    %v721 = vsel %vm115, %v697, -inf
    %722 = vmax.xlane.f32.xlu0 %v721
    %v723 = vpop.xlane.xlu0 %722
    %v724 = vsub.f32 %v186, %v702
    %v725 = vsub.f32 %v259, %v705
    %v726 = vsub.f32 %v332, %v708
    %v727 = vsub.f32 %v405, %v711
    %v728 = vsub.f32 %v478, %v714
    %v729 = vsub.f32 %v551, %v717
    %v730 = vsub.f32 %v624, %v720
    %v731 = vsub.f32 %v697, %v723
    %v732 = vmul.f32 %v724, 1.442695
    %v733 = vpow.pop %v732
    %v734 = vmul.f32 %v725, 1.442695
    %v735 = vpow.pop %v734
    %v736 = vmul.f32 %v726, 1.442695
    %v737 = vpow.pop %v736
    %v738 = vmul.f32 %v727, 1.442695
    %v739 = vpow.pop %v738
    %v740 = vmul.f32 %v728, 1.442695
    %v741 = vpow.pop %v740
    %v742 = vmul.f32 %v729, 1.442695
    %v743 = vpow.pop %v742
    %v744 = vmul.f32 %v730, 1.442695
    %v745 = vpow.pop %v744
    %v746 = vmul.f32 %v731, 1.442695
    %v747 = vpow.pop %v746
    %v748 = vsel %vm115, %v733, 0.0
    %749 = vadd.xlane.f32.xlu0 %v748
    %v750 = vpop.xlane.xlu0 %749
    %v751 = vsel %vm115, %v735, 0.0
    %752 = vadd.xlane.f32.xlu0 %v751
    %v753 = vpop.xlane.xlu0 %752
    %v754 = vsel %vm115, %v737, 0.0
    %755 = vadd.xlane.f32.xlu0 %v754
    %v756 = vpop.xlane.xlu0 %755
    %v757 = vsel %vm115, %v739, 0.0
    %758 = vadd.xlane.f32.xlu0 %v757
    %v759 = vpop.xlane.xlu0 %758
    %v760 = vsel %vm115, %v741, 0.0
    %761 = vadd.xlane.f32.xlu0 %v760
    %v762 = vpop.xlane.xlu0 %761
    %v763 = vsel %vm115, %v743, 0.0
    %764 = vadd.xlane.f32.xlu0 %v763
    %v765 = vpop.xlane.xlu0 %764
    %v766 = vsel %vm115, %v745, 0.0
    %767 = vadd.xlane.f32.xlu0 %v766
    %v768 = vpop.xlane.xlu0 %767
    %v769 = vsel %vm115, %v747, 0.0
    %770 = vadd.xlane.f32.xlu0 %v769
    %v771 = vpop.xlane.xlu0 %770
    %v772 = vrcp.pop %v750
    %v773 = vmul.f32 %v733, %v772
    %v774 = vrcp.pop %v753
    %v775 = vmul.f32 %v735, %v774
    %v776 = vrcp.pop %v756
    %v777 = vmul.f32 %v737, %v776
    %v778 = vrcp.pop %v759
    %v779 = vmul.f32 %v739, %v778
    %v780 = vrcp.pop %v762
    %v781 = vmul.f32 %v741, %v780
    %v782 = vrcp.pop %v765
    %v783 = vmul.f32 %v743, %v782
    %v784 = vrcp.pop %v768
    %v785 = vmul.f32 %v745, %v784
    %v786 = vrcp.pop %v771
    %v787 = vmul.f32 %v747, %v786
    %v788 = vld [vmem:[#allocation2] sm:$0xff]
    %v789 = vld [vmem:[#allocation2 + $0x8] sm:$0xff]
    %v790 = vld [vmem:[#allocation2 + $0x10] sm:$0xff]
    %v791 = vld [vmem:[#allocation2 + $0x18] sm:$0xff]
    %v792 = vld [vmem:[#allocation2 + $0x20] sm:$0xff]
    %v793 = vld [vmem:[#allocation2 + $0x28] sm:$0xff]
    %v794 = vld [vmem:[#allocation2 + $0x30] sm:$0xff]
    %v795 = vld [vmem:[#allocation2 + $0x38] sm:$0xff]
    %v797 = vsel %vm115, %v773, 0
    %799 = vmatprep.subr.mxu0 0.0
    %800 = vmatpush1.msra.mxu0 0.0
    %801 = vmatprep.subr.mxu0 0.0
    %802 = vmatpush1.msra.mxu0 0.0
    %803 = vmatprep.subr.mxu0 0.0
    %804 = vmatpush1.msra.mxu0 0.0
    %805 = vmatprep.subr.mxu0 0.0
    %806 = vmatpush1.msra.mxu0 0.0
    %807 = vmatprep.subr.mxu0 0.0
    %808 = vmatpush1.msra.mxu0 0.0
    %809 = vmatprep.subr.mxu0 0.0
    %810 = vmatpush1.msra.mxu0 0.0
    %811 = vmatprep.subr.mxu0 0.0
    %812 = vmatpush1.msra.mxu0 0.0
    %813 = vmatprep.subr.mxu0 0.0
    %814 = vmatpush1.msra.mxu0 0.0
    %815 = vmatprep.subr.mxu0 0.0
    %816 = vmatpush1.msra.mxu0 0.0
    %817 = vmatprep.subr.mxu0 0.0
    %818 = vmatpush1.msra.mxu0 0.0
    %819 = vmatprep.subr.mxu0 0.0
    %820 = vmatpush1.msra.mxu0 0.0
    %821 = vmatprep.subr.mxu0 0.0
    %822 = vmatpush1.msra.mxu0 0.0
    %823 = vmatprep.subr.mxu0 0.0
    %824 = vmatpush1.msra.mxu0 0.0
    %825 = vmatprep.subr.mxu0 0.0
    %826 = vmatpush1.msra.mxu0 0.0
    %827 = vmatprep.subr.mxu0 0.0
    %828 = vmatpush1.msra.mxu0 0.0
    %829 = vmatprep.subr.mxu0 0.0
    %830 = vmatpush1.msra.mxu0 %v788
    %831 = vmatprep.subr.mxu0 0.0
    %832 = vmatpush2.msra.mxu0 0.0
    %833 = vmatprep.subr.mxu0 0.0
    %834 = vmatpush2.msra.mxu0 0.0
    %835 = vmatprep.subr.mxu0 0.0
    %836 = vmatpush2.msra.mxu0 0.0
    %837 = vmatprep.subr.mxu0 0.0
    %838 = vmatpush2.msra.mxu0 0.0
    %839 = vmatprep.subr.mxu0 0.0
    %840 = vmatpush2.msra.mxu0 0.0
    %841 = vmatprep.subr.mxu0 0.0
    %842 = vmatpush2.msra.mxu0 0.0
    %843 = vmatprep.subr.mxu0 0.0
    %844 = vmatpush2.msra.mxu0 0.0
    %845 = vmatprep.subr.mxu0 0.0
    %846 = vmatpush2.msra.mxu0 0.0
    %847 = vmatprep.subr.mxu0 0.0
    %848 = vmatpush2.msra.mxu0 0.0
    %849 = vmatprep.subr.mxu0 0.0
    %850 = vmatpush2.msra.mxu0 0.0
    %851 = vmatprep.subr.mxu0 0.0
    %852 = vmatpush2.msra.mxu0 0.0
    %853 = vmatprep.subr.mxu0 0.0
    %854 = vmatpush2.msra.mxu0 0.0
    %855 = vmatprep.subr.mxu0 0.0
    %856 = vmatpush2.msra.mxu0 0.0
    %857 = vmatprep.subr.mxu0 0.0
    %858 = vmatpush2.msra.mxu0 0.0
    %859 = vmatprep.subr.mxu0 0.0
    %860 = vmatpush2.msra.mxu0 0.0
    %861 = vmatprep.subr.mxu0 0.0
    %862 = vmatpush2.msra.mxu0 0.0
    %863 = vmatprep.mubr.f32.mxu0 0.0
    %864 = vmatmul.mubr.f32.gmra.mxu0 %v797
    %v865 = vpop.f32.mrf.mxu0
    %v866 = vadd.f32 0.0, %v865
    %v867 = vpop.f32.mrf.mxu0
    %868 = vdwg.mxu0
    %v870 = vsel %vm115, %v775, 0
    %872 = vmatprep.subr.mxu0 0.0
    %873 = vmatpush1.msra.mxu0 0.0
    %874 = vmatprep.subr.mxu0 0.0
    %875 = vmatpush1.msra.mxu0 0.0
    %876 = vmatprep.subr.mxu0 0.0
    %877 = vmatpush1.msra.mxu0 0.0
    %878 = vmatprep.subr.mxu0 0.0
    %879 = vmatpush1.msra.mxu0 0.0
    %880 = vmatprep.subr.mxu0 0.0
    %881 = vmatpush1.msra.mxu0 0.0
    %882 = vmatprep.subr.mxu0 0.0
    %883 = vmatpush1.msra.mxu0 0.0
    %884 = vmatprep.subr.mxu0 0.0
    %885 = vmatpush1.msra.mxu0 0.0
    %886 = vmatprep.subr.mxu0 0.0
    %887 = vmatpush1.msra.mxu0 0.0
    %888 = vmatprep.subr.mxu0 0.0
    %889 = vmatpush1.msra.mxu0 0.0
    %890 = vmatprep.subr.mxu0 0.0
    %891 = vmatpush1.msra.mxu0 0.0
    %892 = vmatprep.subr.mxu0 0.0
    %893 = vmatpush1.msra.mxu0 0.0
    %894 = vmatprep.subr.mxu0 0.0
    %895 = vmatpush1.msra.mxu0 0.0
    %896 = vmatprep.subr.mxu0 0.0
    %897 = vmatpush1.msra.mxu0 0.0
    %898 = vmatprep.subr.mxu0 0.0
    %899 = vmatpush1.msra.mxu0 0.0
    %900 = vmatprep.subr.mxu0 0.0
    %901 = vmatpush1.msra.mxu0 0.0
    %902 = vmatprep.subr.mxu0 0.0
    %903 = vmatpush1.msra.mxu0 %v789
    %904 = vmatprep.subr.mxu0 0.0
    %905 = vmatpush2.msra.mxu0 0.0
    %906 = vmatprep.subr.mxu0 0.0
    %907 = vmatpush2.msra.mxu0 0.0
    %908 = vmatprep.subr.mxu0 0.0
    %909 = vmatpush2.msra.mxu0 0.0
    %910 = vmatprep.subr.mxu0 0.0
    %911 = vmatpush2.msra.mxu0 0.0
    %912 = vmatprep.subr.mxu0 0.0
    %913 = vmatpush2.msra.mxu0 0.0
    %914 = vmatprep.subr.mxu0 0.0
    %915 = vmatpush2.msra.mxu0 0.0
    %916 = vmatprep.subr.mxu0 0.0
    %917 = vmatpush2.msra.mxu0 0.0
    %918 = vmatprep.subr.mxu0 0.0
    %919 = vmatpush2.msra.mxu0 0.0
    %920 = vmatprep.subr.mxu0 0.0
    %921 = vmatpush2.msra.mxu0 0.0
    %922 = vmatprep.subr.mxu0 0.0
    %923 = vmatpush2.msra.mxu0 0.0
    %924 = vmatprep.subr.mxu0 0.0
    %925 = vmatpush2.msra.mxu0 0.0
    %926 = vmatprep.subr.mxu0 0.0
    %927 = vmatpush2.msra.mxu0 0.0
    %928 = vmatprep.subr.mxu0 0.0
    %929 = vmatpush2.msra.mxu0 0.0
    %930 = vmatprep.subr.mxu0 0.0
    %931 = vmatpush2.msra.mxu0 0.0
    %932 = vmatprep.subr.mxu0 0.0
    %933 = vmatpush2.msra.mxu0 0.0
    %934 = vmatprep.subr.mxu0 0.0
    %935 = vmatpush2.msra.mxu0 0.0
    %936 = vmatprep.mubr.f32.mxu0 0.0
    %937 = vmatmul.mubr.f32.gmra.mxu0 %v870
    %v938 = vpop.f32.mrf.mxu0
    %v939 = vadd.f32 0.0, %v938
    %v940 = vpop.f32.mrf.mxu0
    %941 = vdwg.mxu0
    %v943 = vsel %vm115, %v777, 0
    %945 = vmatprep.subr.mxu0 0.0
    %946 = vmatpush1.msra.mxu0 0.0
    %947 = vmatprep.subr.mxu0 0.0
    %948 = vmatpush1.msra.mxu0 0.0
    %949 = vmatprep.subr.mxu0 0.0
    %950 = vmatpush1.msra.mxu0 0.0
    %951 = vmatprep.subr.mxu0 0.0
    %952 = vmatpush1.msra.mxu0 0.0
    %953 = vmatprep.subr.mxu0 0.0
    %954 = vmatpush1.msra.mxu0 0.0
    %955 = vmatprep.subr.mxu0 0.0
    %956 = vmatpush1.msra.mxu0 0.0
    %957 = vmatprep.subr.mxu0 0.0
    %958 = vmatpush1.msra.mxu0 0.0
    %959 = vmatprep.subr.mxu0 0.0
    %960 = vmatpush1.msra.mxu0 0.0
    %961 = vmatprep.subr.mxu0 0.0
    %962 = vmatpush1.msra.mxu0 0.0
    %963 = vmatprep.subr.mxu0 0.0
    %964 = vmatpush1.msra.mxu0 0.0
    %965 = vmatprep.subr.mxu0 0.0
    %966 = vmatpush1.msra.mxu0 0.0
    %967 = vmatprep.subr.mxu0 0.0
    %968 = vmatpush1.msra.mxu0 0.0
    %969 = vmatprep.subr.mxu0 0.0
    %970 = vmatpush1.msra.mxu0 0.0
    %971 = vmatprep.subr.mxu0 0.0
    %972 = vmatpush1.msra.mxu0 0.0
    %973 = vmatprep.subr.mxu0 0.0
    %974 = vmatpush1.msra.mxu0 0.0
    %975 = vmatprep.subr.mxu0 0.0
    %976 = vmatpush1.msra.mxu0 %v790
    %977 = vmatprep.subr.mxu0 0.0
    %978 = vmatpush2.msra.mxu0 0.0
    %979 = vmatprep.subr.mxu0 0.0
    %980 = vmatpush2.msra.mxu0 0.0
    %981 = vmatprep.subr.mxu0 0.0
    %982 = vmatpush2.msra.mxu0 0.0
    %983 = vmatprep.subr.mxu0 0.0
    %984 = vmatpush2.msra.mxu0 0.0
    %985 = vmatprep.subr.mxu0 0.0
    %986 = vmatpush2.msra.mxu0 0.0
    %987 = vmatprep.subr.mxu0 0.0
    %988 = vmatpush2.msra.mxu0 0.0
    %989 = vmatprep.subr.mxu0 0.0
    %990 = vmatpush2.msra.mxu0 0.0
    %991 = vmatprep.subr.mxu0 0.0
    %992 = vmatpush2.msra.mxu0 0.0
    %993 = vmatprep.subr.mxu0 0.0
    %994 = vmatpush2.msra.mxu0 0.0
    %995 = vmatprep.subr.mxu0 0.0
    %996 = vmatpush2.msra.mxu0 0.0
    %997 = vmatprep.subr.mxu0 0.0
    %998 = vmatpush2.msra.mxu0 0.0
    %999 = vmatprep.subr.mxu0 0.0
    %1000 = vmatpush2.msra.mxu0 0.0
    %1001 = vmatprep.subr.mxu0 0.0
    %1002 = vmatpush2.msra.mxu0 0.0
    %1003 = vmatprep.subr.mxu0 0.0
    %1004 = vmatpush2.msra.mxu0 0.0
    %1005 = vmatprep.subr.mxu0 0.0
    %1006 = vmatpush2.msra.mxu0 0.0
    %1007 = vmatprep.subr.mxu0 0.0
    %1008 = vmatpush2.msra.mxu0 0.0
    %1009 = vmatprep.mubr.f32.mxu0 0.0
    %1010 = vmatmul.mubr.f32.gmra.mxu0 %v943
    %v1011 = vpop.f32.mrf.mxu0
    %v1012 = vadd.f32 0.0, %v1011
    %v1013 = vpop.f32.mrf.mxu0
    %1014 = vdwg.mxu0
    %v1016 = vsel %vm115, %v779, 0
    %1018 = vmatprep.subr.mxu0 0.0
    %1019 = vmatpush1.msra.mxu0 0.0
    %1020 = vmatprep.subr.mxu0 0.0
    %1021 = vmatpush1.msra.mxu0 0.0
    %1022 = vmatprep.subr.mxu0 0.0
    %1023 = vmatpush1.msra.mxu0 0.0
    %1024 = vmatprep.subr.mxu0 0.0
    %1025 = vmatpush1.msra.mxu0 0.0
    %1026 = vmatprep.subr.mxu0 0.0
    %1027 = vmatpush1.msra.mxu0 0.0
    %1028 = vmatprep.subr.mxu0 0.0
    %1029 = vmatpush1.msra.mxu0 0.0
    %1030 = vmatprep.subr.mxu0 0.0
    %1031 = vmatpush1.msra.mxu0 0.0
    %1032 = vmatprep.subr.mxu0 0.0
    %1033 = vmatpush1.msra.mxu0 0.0
    %1034 = vmatprep.subr.mxu0 0.0
    %1035 = vmatpush1.msra.mxu0 0.0
    %1036 = vmatprep.subr.mxu0 0.0
    %1037 = vmatpush1.msra.mxu0 0.0
    %1038 = vmatprep.subr.mxu0 0.0
    %1039 = vmatpush1.msra.mxu0 0.0
    %1040 = vmatprep.subr.mxu0 0.0
    %1041 = vmatpush1.msra.mxu0 0.0
    %1042 = vmatprep.subr.mxu0 0.0
    %1043 = vmatpush1.msra.mxu0 0.0
    %1044 = vmatprep.subr.mxu0 0.0
    %1045 = vmatpush1.msra.mxu0 0.0
    %1046 = vmatprep.subr.mxu0 0.0
    %1047 = vmatpush1.msra.mxu0 0.0
    %1048 = vmatprep.subr.mxu0 0.0
    %1049 = vmatpush1.msra.mxu0 %v791
    %1050 = vmatprep.subr.mxu0 0.0
    %1051 = vmatpush2.msra.mxu0 0.0
    %1052 = vmatprep.subr.mxu0 0.0
    %1053 = vmatpush2.msra.mxu0 0.0
    %1054 = vmatprep.subr.mxu0 0.0
    %1055 = vmatpush2.msra.mxu0 0.0
    %1056 = vmatprep.subr.mxu0 0.0
    %1057 = vmatpush2.msra.mxu0 0.0
    %1058 = vmatprep.subr.mxu0 0.0
    %1059 = vmatpush2.msra.mxu0 0.0
    %1060 = vmatprep.subr.mxu0 0.0
    %1061 = vmatpush2.msra.mxu0 0.0
    %1062 = vmatprep.subr.mxu0 0.0
    %1063 = vmatpush2.msra.mxu0 0.0
    %1064 = vmatprep.subr.mxu0 0.0
    %1065 = vmatpush2.msra.mxu0 0.0
    %1066 = vmatprep.subr.mxu0 0.0
    %1067 = vmatpush2.msra.mxu0 0.0
    %1068 = vmatprep.subr.mxu0 0.0
    %1069 = vmatpush2.msra.mxu0 0.0
    %1070 = vmatprep.subr.mxu0 0.0
    %1071 = vmatpush2.msra.mxu0 0.0
    %1072 = vmatprep.subr.mxu0 0.0
    %1073 = vmatpush2.msra.mxu0 0.0
    %1074 = vmatprep.subr.mxu0 0.0
    %1075 = vmatpush2.msra.mxu0 0.0
    %1076 = vmatprep.subr.mxu0 0.0
    %1077 = vmatpush2.msra.mxu0 0.0
    %1078 = vmatprep.subr.mxu0 0.0
    %1079 = vmatpush2.msra.mxu0 0.0
    %1080 = vmatprep.subr.mxu0 0.0
    %1081 = vmatpush2.msra.mxu0 0.0
    %1082 = vmatprep.mubr.f32.mxu0 0.0
    %1083 = vmatmul.mubr.f32.gmra.mxu0 %v1016
    %v1084 = vpop.f32.mrf.mxu0
    %v1085 = vadd.f32 0.0, %v1084
    %v1086 = vpop.f32.mrf.mxu0
    %1087 = vdwg.mxu0
    %v1089 = vsel %vm115, %v781, 0
    %1091 = vmatprep.subr.mxu0 0.0
    %1092 = vmatpush1.msra.mxu0 0.0
    %1093 = vmatprep.subr.mxu0 0.0
    %1094 = vmatpush1.msra.mxu0 0.0
    %1095 = vmatprep.subr.mxu0 0.0
    %1096 = vmatpush1.msra.mxu0 0.0
    %1097 = vmatprep.subr.mxu0 0.0
    %1098 = vmatpush1.msra.mxu0 0.0
    %1099 = vmatprep.subr.mxu0 0.0
    %1100 = vmatpush1.msra.mxu0 0.0
    %1101 = vmatprep.subr.mxu0 0.0
    %1102 = vmatpush1.msra.mxu0 0.0
    %1103 = vmatprep.subr.mxu0 0.0
    %1104 = vmatpush1.msra.mxu0 0.0
    %1105 = vmatprep.subr.mxu0 0.0
    %1106 = vmatpush1.msra.mxu0 0.0
    %1107 = vmatprep.subr.mxu0 0.0
    %1108 = vmatpush1.msra.mxu0 0.0
    %1109 = vmatprep.subr.mxu0 0.0
    %1110 = vmatpush1.msra.mxu0 0.0
    %1111 = vmatprep.subr.mxu0 0.0
    %1112 = vmatpush1.msra.mxu0 0.0
    %1113 = vmatprep.subr.mxu0 0.0
    %1114 = vmatpush1.msra.mxu0 0.0
    %1115 = vmatprep.subr.mxu0 0.0
    %1116 = vmatpush1.msra.mxu0 0.0
    %1117 = vmatprep.subr.mxu0 0.0
    %1118 = vmatpush1.msra.mxu0 0.0
    %1119 = vmatprep.subr.mxu0 0.0
    %1120 = vmatpush1.msra.mxu0 0.0
    %1121 = vmatprep.subr.mxu0 0.0
    %1122 = vmatpush1.msra.mxu0 %v792
    %1123 = vmatprep.subr.mxu0 0.0
    %1124 = vmatpush2.msra.mxu0 0.0
    %1125 = vmatprep.subr.mxu0 0.0
    %1126 = vmatpush2.msra.mxu0 0.0
    %1127 = vmatprep.subr.mxu0 0.0
    %1128 = vmatpush2.msra.mxu0 0.0
    %1129 = vmatprep.subr.mxu0 0.0
    %1130 = vmatpush2.msra.mxu0 0.0
    %1131 = vmatprep.subr.mxu0 0.0
    %1132 = vmatpush2.msra.mxu0 0.0
    %1133 = vmatprep.subr.mxu0 0.0
    %1134 = vmatpush2.msra.mxu0 0.0
    %1135 = vmatprep.subr.mxu0 0.0
    %1136 = vmatpush2.msra.mxu0 0.0
    %1137 = vmatprep.subr.mxu0 0.0
    %1138 = vmatpush2.msra.mxu0 0.0
    %1139 = vmatprep.subr.mxu0 0.0
    %1140 = vmatpush2.msra.mxu0 0.0
    %1141 = vmatprep.subr.mxu0 0.0
    %1142 = vmatpush2.msra.mxu0 0.0
    %1143 = vmatprep.subr.mxu0 0.0
    %1144 = vmatpush2.msra.mxu0 0.0
    %1145 = vmatprep.subr.mxu0 0.0
    %1146 = vmatpush2.msra.mxu0 0.0
    %1147 = vmatprep.subr.mxu0 0.0
    %1148 = vmatpush2.msra.mxu0 0.0
    %1149 = vmatprep.subr.mxu0 0.0
    %1150 = vmatpush2.msra.mxu0 0.0
    %1151 = vmatprep.subr.mxu0 0.0
    %1152 = vmatpush2.msra.mxu0 0.0
    %1153 = vmatprep.subr.mxu0 0.0
    %1154 = vmatpush2.msra.mxu0 0.0
    %1155 = vmatprep.mubr.f32.mxu0 0.0
    %1156 = vmatmul.mubr.f32.gmra.mxu0 %v1089
    %v1157 = vpop.f32.mrf.mxu0
    %v1158 = vadd.f32 0.0, %v1157
    %v1159 = vpop.f32.mrf.mxu0
    %1160 = vdwg.mxu0
    %v1162 = vsel %vm115, %v783, 0
    %1164 = vmatprep.subr.mxu0 0.0
    %1165 = vmatpush1.msra.mxu0 0.0
    %1166 = vmatprep.subr.mxu0 0.0
    %1167 = vmatpush1.msra.mxu0 0.0
    %1168 = vmatprep.subr.mxu0 0.0
    %1169 = vmatpush1.msra.mxu0 0.0
    %1170 = vmatprep.subr.mxu0 0.0
    %1171 = vmatpush1.msra.mxu0 0.0
    %1172 = vmatprep.subr.mxu0 0.0
    %1173 = vmatpush1.msra.mxu0 0.0
    %1174 = vmatprep.subr.mxu0 0.0
    %1175 = vmatpush1.msra.mxu0 0.0
    %1176 = vmatprep.subr.mxu0 0.0
    %1177 = vmatpush1.msra.mxu0 0.0
    %1178 = vmatprep.subr.mxu0 0.0
    %1179 = vmatpush1.msra.mxu0 0.0
    %1180 = vmatprep.subr.mxu0 0.0
    %1181 = vmatpush1.msra.mxu0 0.0
    %1182 = vmatprep.subr.mxu0 0.0
    %1183 = vmatpush1.msra.mxu0 0.0
    %1184 = vmatprep.subr.mxu0 0.0
    %1185 = vmatpush1.msra.mxu0 0.0
    %1186 = vmatprep.subr.mxu0 0.0
    %1187 = vmatpush1.msra.mxu0 0.0
    %1188 = vmatprep.subr.mxu0 0.0
    %1189 = vmatpush1.msra.mxu0 0.0
    %1190 = vmatprep.subr.mxu0 0.0
    %1191 = vmatpush1.msra.mxu0 0.0
    %1192 = vmatprep.subr.mxu0 0.0
    %1193 = vmatpush1.msra.mxu0 0.0
    %1194 = vmatprep.subr.mxu0 0.0
    %1195 = vmatpush1.msra.mxu0 %v793
    %1196 = vmatprep.subr.mxu0 0.0
    %1197 = vmatpush2.msra.mxu0 0.0
    %1198 = vmatprep.subr.mxu0 0.0
    %1199 = vmatpush2.msra.mxu0 0.0
    %1200 = vmatprep.subr.mxu0 0.0
    %1201 = vmatpush2.msra.mxu0 0.0
    %1202 = vmatprep.subr.mxu0 0.0
    %1203 = vmatpush2.msra.mxu0 0.0
    %1204 = vmatprep.subr.mxu0 0.0
    %1205 = vmatpush2.msra.mxu0 0.0
    %1206 = vmatprep.subr.mxu0 0.0
    %1207 = vmatpush2.msra.mxu0 0.0
    %1208 = vmatprep.subr.mxu0 0.0
    %1209 = vmatpush2.msra.mxu0 0.0
    %1210 = vmatprep.subr.mxu0 0.0
    %1211 = vmatpush2.msra.mxu0 0.0
    %1212 = vmatprep.subr.mxu0 0.0
    %1213 = vmatpush2.msra.mxu0 0.0
    %1214 = vmatprep.subr.mxu0 0.0
    %1215 = vmatpush2.msra.mxu0 0.0
    %1216 = vmatprep.subr.mxu0 0.0
    %1217 = vmatpush2.msra.mxu0 0.0
    %1218 = vmatprep.subr.mxu0 0.0
    %1219 = vmatpush2.msra.mxu0 0.0
    %1220 = vmatprep.subr.mxu0 0.0
    %1221 = vmatpush2.msra.mxu0 0.0
    %1222 = vmatprep.subr.mxu0 0.0
    %1223 = vmatpush2.msra.mxu0 0.0
    %1224 = vmatprep.subr.mxu0 0.0
    %1225 = vmatpush2.msra.mxu0 0.0
    %1226 = vmatprep.subr.mxu0 0.0
    %1227 = vmatpush2.msra.mxu0 0.0
    %1228 = vmatprep.mubr.f32.mxu0 0.0
    %1229 = vmatmul.mubr.f32.gmra.mxu0 %v1162
    %v1230 = vpop.f32.mrf.mxu0
    %v1231 = vadd.f32 0.0, %v1230
    %v1232 = vpop.f32.mrf.mxu0
    %1233 = vdwg.mxu0
    %v1235 = vsel %vm115, %v785, 0
    %1237 = vmatprep.subr.mxu0 0.0
    %1238 = vmatpush1.msra.mxu0 0.0
    %1239 = vmatprep.subr.mxu0 0.0
    %1240 = vmatpush1.msra.mxu0 0.0
    %1241 = vmatprep.subr.mxu0 0.0
    %1242 = vmatpush1.msra.mxu0 0.0
    %1243 = vmatprep.subr.mxu0 0.0
    %1244 = vmatpush1.msra.mxu0 0.0
    %1245 = vmatprep.subr.mxu0 0.0
    %1246 = vmatpush1.msra.mxu0 0.0
    %1247 = vmatprep.subr.mxu0 0.0
    %1248 = vmatpush1.msra.mxu0 0.0
    %1249 = vmatprep.subr.mxu0 0.0
    %1250 = vmatpush1.msra.mxu0 0.0
    %1251 = vmatprep.subr.mxu0 0.0
    %1252 = vmatpush1.msra.mxu0 0.0
    %1253 = vmatprep.subr.mxu0 0.0
    %1254 = vmatpush1.msra.mxu0 0.0
    %1255 = vmatprep.subr.mxu0 0.0
    %1256 = vmatpush1.msra.mxu0 0.0
    %1257 = vmatprep.subr.mxu0 0.0
    %1258 = vmatpush1.msra.mxu0 0.0
    %1259 = vmatprep.subr.mxu0 0.0
    %1260 = vmatpush1.msra.mxu0 0.0
    %1261 = vmatprep.subr.mxu0 0.0
    %1262 = vmatpush1.msra.mxu0 0.0
    %1263 = vmatprep.subr.mxu0 0.0
    %1264 = vmatpush1.msra.mxu0 0.0
    %1265 = vmatprep.subr.mxu0 0.0
    %1266 = vmatpush1.msra.mxu0 0.0
    %1267 = vmatprep.subr.mxu0 0.0
    %1268 = vmatpush1.msra.mxu0 %v794
    %1269 = vmatprep.subr.mxu0 0.0
    %1270 = vmatpush2.msra.mxu0 0.0
    %1271 = vmatprep.subr.mxu0 0.0
    %1272 = vmatpush2.msra.mxu0 0.0
    %1273 = vmatprep.subr.mxu0 0.0
    %1274 = vmatpush2.msra.mxu0 0.0
    %1275 = vmatprep.subr.mxu0 0.0
    %1276 = vmatpush2.msra.mxu0 0.0
    %1277 = vmatprep.subr.mxu0 0.0
    %1278 = vmatpush2.msra.mxu0 0.0
    %1279 = vmatprep.subr.mxu0 0.0
    %1280 = vmatpush2.msra.mxu0 0.0
    %1281 = vmatprep.subr.mxu0 0.0
    %1282 = vmatpush2.msra.mxu0 0.0
    %1283 = vmatprep.subr.mxu0 0.0
    %1284 = vmatpush2.msra.mxu0 0.0
    %1285 = vmatprep.subr.mxu0 0.0
    %1286 = vmatpush2.msra.mxu0 0.0
    %1287 = vmatprep.subr.mxu0 0.0
    %1288 = vmatpush2.msra.mxu0 0.0
    %1289 = vmatprep.subr.mxu0 0.0
    %1290 = vmatpush2.msra.mxu0 0.0
    %1291 = vmatprep.subr.mxu0 0.0
    %1292 = vmatpush2.msra.mxu0 0.0
    %1293 = vmatprep.subr.mxu0 0.0
    %1294 = vmatpush2.msra.mxu0 0.0
    %1295 = vmatprep.subr.mxu0 0.0
    %1296 = vmatpush2.msra.mxu0 0.0
    %1297 = vmatprep.subr.mxu0 0.0
    %1298 = vmatpush2.msra.mxu0 0.0
    %1299 = vmatprep.subr.mxu0 0.0
    %1300 = vmatpush2.msra.mxu0 0.0
    %1301 = vmatprep.mubr.f32.mxu0 0.0
    %1302 = vmatmul.mubr.f32.gmra.mxu0 %v1235
    %v1303 = vpop.f32.mrf.mxu0
    %v1304 = vadd.f32 0.0, %v1303
    %v1305 = vpop.f32.mrf.mxu0
    %1306 = vdwg.mxu0
    %v1308 = vsel %vm115, %v787, 0
    %1310 = vmatprep.subr.mxu0 0.0
    %1311 = vmatpush1.msra.mxu0 0.0
    %1312 = vmatprep.subr.mxu0 0.0
    %1313 = vmatpush1.msra.mxu0 0.0
    %1314 = vmatprep.subr.mxu0 0.0
    %1315 = vmatpush1.msra.mxu0 0.0
    %1316 = vmatprep.subr.mxu0 0.0
    %1317 = vmatpush1.msra.mxu0 0.0
    %1318 = vmatprep.subr.mxu0 0.0
    %1319 = vmatpush1.msra.mxu0 0.0
    %1320 = vmatprep.subr.mxu0 0.0
    %1321 = vmatpush1.msra.mxu0 0.0
    %1322 = vmatprep.subr.mxu0 0.0
    %1323 = vmatpush1.msra.mxu0 0.0
    %1324 = vmatprep.subr.mxu0 0.0
    %1325 = vmatpush1.msra.mxu0 0.0
    %1326 = vmatprep.subr.mxu0 0.0
    %1327 = vmatpush1.msra.mxu0 0.0
    %1328 = vmatprep.subr.mxu0 0.0
    %1329 = vmatpush1.msra.mxu0 0.0
    %1330 = vmatprep.subr.mxu0 0.0
    %1331 = vmatpush1.msra.mxu0 0.0
    %1332 = vmatprep.subr.mxu0 0.0
    %1333 = vmatpush1.msra.mxu0 0.0
    %1334 = vmatprep.subr.mxu0 0.0
    %1335 = vmatpush1.msra.mxu0 0.0
    %1336 = vmatprep.subr.mxu0 0.0
    %1337 = vmatpush1.msra.mxu0 0.0
    %1338 = vmatprep.subr.mxu0 0.0
    %1339 = vmatpush1.msra.mxu0 0.0
    %1340 = vmatprep.subr.mxu0 0.0
    %1341 = vmatpush1.msra.mxu0 %v795
    %1342 = vmatprep.subr.mxu0 0.0
    %1343 = vmatpush2.msra.mxu0 0.0
    %1344 = vmatprep.subr.mxu0 0.0
    %1345 = vmatpush2.msra.mxu0 0.0
    %1346 = vmatprep.subr.mxu0 0.0
    %1347 = vmatpush2.msra.mxu0 0.0
    %1348 = vmatprep.subr.mxu0 0.0
    %1349 = vmatpush2.msra.mxu0 0.0
    %1350 = vmatprep.subr.mxu0 0.0
    %1351 = vmatpush2.msra.mxu0 0.0
    %1352 = vmatprep.subr.mxu0 0.0
    %1353 = vmatpush2.msra.mxu0 0.0
    %1354 = vmatprep.subr.mxu0 0.0
    %1355 = vmatpush2.msra.mxu0 0.0
    %1356 = vmatprep.subr.mxu0 0.0
    %1357 = vmatpush2.msra.mxu0 0.0
    %1358 = vmatprep.subr.mxu0 0.0
    %1359 = vmatpush2.msra.mxu0 0.0
    %1360 = vmatprep.subr.mxu0 0.0
    %1361 = vmatpush2.msra.mxu0 0.0
    %1362 = vmatprep.subr.mxu0 0.0
    %1363 = vmatpush2.msra.mxu0 0.0
    %1364 = vmatprep.subr.mxu0 0.0
    %1365 = vmatpush2.msra.mxu0 0.0
    %1366 = vmatprep.subr.mxu0 0.0
    %1367 = vmatpush2.msra.mxu0 0.0
    %1368 = vmatprep.subr.mxu0 0.0
    %1369 = vmatpush2.msra.mxu0 0.0
    %1370 = vmatprep.subr.mxu0 0.0
    %1371 = vmatpush2.msra.mxu0 0.0
    %1372 = vmatprep.subr.mxu0 0.0
    %1373 = vmatpush2.msra.mxu0 0.0
    %1374 = vmatprep.mubr.f32.mxu0 0.0
    %1375 = vmatmul.mubr.f32.gmra.mxu0 %v1308
    %v1376 = vpop.f32.mrf.mxu0
    %v1377 = vadd.f32 0.0, %v1376
    %v1378 = vpop.f32.mrf.mxu0
    %1379 = vdwg.mxu0
    %v1380 = vld [vmem:[%s5] sm:$0xff]
    %v1381 = vld [vmem:[%s5 + $0x8] sm:$0xff]
    %v1382 = vld [vmem:[%s5 + $0x10] sm:$0xff]
    %v1383 = vld [vmem:[%s5 + $0x18] sm:$0xff]
    %v1385 = vsel %vm115, %v866, 0
    %v1388 = vsel %vm115, %v939, 0
    %1390 = vmatprep.subr.mxu0 0.0
    %1391 = vmatpush1.msra.mxu0 0.0
    %1392 = vmatprep.subr.mxu0 0.0
    %1393 = vmatpush1.msra.mxu0 0.0
    %1394 = vmatprep.subr.mxu0 0.0
    %1395 = vmatpush1.msra.mxu0 0.0
    %1396 = vmatprep.subr.mxu0 0.0
    %1397 = vmatpush1.msra.mxu0 0.0
    %1398 = vmatprep.subr.mxu0 0.0
    %1399 = vmatpush1.msra.mxu0 0.0
    %1400 = vmatprep.subr.mxu0 0.0
    %1401 = vmatpush1.msra.mxu0 0.0
    %1402 = vmatprep.subr.mxu0 0.0
    %1403 = vmatpush1.msra.mxu0 0.0
    %1404 = vmatprep.subr.mxu0 0.0
    %1405 = vmatpush1.msra.mxu0 0.0
    %1406 = vmatprep.subr.mxu0 0.0
    %1407 = vmatpush1.msra.mxu0 0.0
    %1408 = vmatprep.subr.mxu0 0.0
    %1409 = vmatpush1.msra.mxu0 0.0
    %1410 = vmatprep.subr.mxu0 0.0
    %1411 = vmatpush1.msra.mxu0 0.0
    %1412 = vmatprep.subr.mxu0 0.0
    %1413 = vmatpush1.msra.mxu0 0.0
    %1414 = vmatprep.subr.mxu0 0.0
    %1415 = vmatpush1.msra.mxu0 0.0
    %1416 = vmatprep.subr.mxu0 0.0
    %1417 = vmatpush1.msra.mxu0 0.0
    %1418 = vmatprep.subr.mxu0 0.0
    %1419 = vmatpush1.msra.mxu0 0.0
    %1420 = vmatprep.subr.mxu0 0.0
    %1421 = vmatpush1.msra.mxu0 %v1380
    %1422 = vmatprep.subr.mxu0 0.0
    %1423 = vmatpush2.msra.mxu0 0.0
    %1424 = vmatprep.subr.mxu0 0.0
    %1425 = vmatpush2.msra.mxu0 0.0
    %1426 = vmatprep.subr.mxu0 0.0
    %1427 = vmatpush2.msra.mxu0 0.0
    %1428 = vmatprep.subr.mxu0 0.0
    %1429 = vmatpush2.msra.mxu0 0.0
    %1430 = vmatprep.subr.mxu0 0.0
    %1431 = vmatpush2.msra.mxu0 0.0
    %1432 = vmatprep.subr.mxu0 0.0
    %1433 = vmatpush2.msra.mxu0 0.0
    %1434 = vmatprep.subr.mxu0 0.0
    %1435 = vmatpush2.msra.mxu0 0.0
    %1436 = vmatprep.subr.mxu0 0.0
    %1437 = vmatpush2.msra.mxu0 0.0
    %1438 = vmatprep.subr.mxu0 0.0
    %1439 = vmatpush2.msra.mxu0 0.0
    %1440 = vmatprep.subr.mxu0 0.0
    %1441 = vmatpush2.msra.mxu0 0.0
    %1442 = vmatprep.subr.mxu0 0.0
    %1443 = vmatpush2.msra.mxu0 0.0
    %1444 = vmatprep.subr.mxu0 0.0
    %1445 = vmatpush2.msra.mxu0 0.0
    %1446 = vmatprep.subr.mxu0 0.0
    %1447 = vmatpush2.msra.mxu0 0.0
    %1448 = vmatprep.subr.mxu0 0.0
    %1449 = vmatpush2.msra.mxu0 0.0
    %1450 = vmatprep.subr.mxu0 0.0
    %1451 = vmatpush2.msra.mxu0 0.0
    %1452 = vmatprep.subr.mxu0 0.0
    %1453 = vmatpush2.msra.mxu0 0.0
    %1454 = vmatprep.mubr.f32.mxu0 0.0
    %1455 = vmatmul.mubr.f32.gmra.mxu0 %v1385
    %v1456 = vpop.f32.mrf.mxu0
    %v1457 = vadd.f32 0.0, %v1456
    %v1458 = vpop.f32.mrf.mxu0
    %1459 = vmatprep.mubr.f32.mxu0 0.0
    %1460 = vmatmul.mubr.f32.gmra.mxu0 %v1388
    %v1461 = vpop.f32.mrf.mxu0
    %v1462 = vadd.f32 0.0, %v1461
    %v1463 = vpop.f32.mrf.mxu0
    %1464 = vdwg.mxu0
    %v1466 = vsel %vm115, %v1012, 0
    %v1469 = vsel %vm115, %v1085, 0
    %1471 = vmatprep.subr.mxu0 0.0
    %1472 = vmatpush1.msra.mxu0 0.0
    %1473 = vmatprep.subr.mxu0 0.0
    %1474 = vmatpush1.msra.mxu0 0.0
    %1475 = vmatprep.subr.mxu0 0.0
    %1476 = vmatpush1.msra.mxu0 0.0
    %1477 = vmatprep.subr.mxu0 0.0
    %1478 = vmatpush1.msra.mxu0 0.0
    %1479 = vmatprep.subr.mxu0 0.0
    %1480 = vmatpush1.msra.mxu0 0.0
    %1481 = vmatprep.subr.mxu0 0.0
    %1482 = vmatpush1.msra.mxu0 0.0
    %1483 = vmatprep.subr.mxu0 0.0
    %1484 = vmatpush1.msra.mxu0 0.0
    %1485 = vmatprep.subr.mxu0 0.0
    %1486 = vmatpush1.msra.mxu0 0.0
    %1487 = vmatprep.subr.mxu0 0.0
    %1488 = vmatpush1.msra.mxu0 0.0
    %1489 = vmatprep.subr.mxu0 0.0
    %1490 = vmatpush1.msra.mxu0 0.0
    %1491 = vmatprep.subr.mxu0 0.0
    %1492 = vmatpush1.msra.mxu0 0.0
    %1493 = vmatprep.subr.mxu0 0.0
    %1494 = vmatpush1.msra.mxu0 0.0
    %1495 = vmatprep.subr.mxu0 0.0
    %1496 = vmatpush1.msra.mxu0 0.0
    %1497 = vmatprep.subr.mxu0 0.0
    %1498 = vmatpush1.msra.mxu0 0.0
    %1499 = vmatprep.subr.mxu0 0.0
    %1500 = vmatpush1.msra.mxu0 0.0
    %1501 = vmatprep.subr.mxu0 0.0
    %1502 = vmatpush1.msra.mxu0 %v1381
    %1503 = vmatprep.subr.mxu0 0.0
    %1504 = vmatpush2.msra.mxu0 0.0
    %1505 = vmatprep.subr.mxu0 0.0
    %1506 = vmatpush2.msra.mxu0 0.0
    %1507 = vmatprep.subr.mxu0 0.0
    %1508 = vmatpush2.msra.mxu0 0.0
    %1509 = vmatprep.subr.mxu0 0.0
    %1510 = vmatpush2.msra.mxu0 0.0
    %1511 = vmatprep.subr.mxu0 0.0
    %1512 = vmatpush2.msra.mxu0 0.0
    %1513 = vmatprep.subr.mxu0 0.0
    %1514 = vmatpush2.msra.mxu0 0.0
    %1515 = vmatprep.subr.mxu0 0.0
    %1516 = vmatpush2.msra.mxu0 0.0
    %1517 = vmatprep.subr.mxu0 0.0
    %1518 = vmatpush2.msra.mxu0 0.0
    %1519 = vmatprep.subr.mxu0 0.0
    %1520 = vmatpush2.msra.mxu0 0.0
    %1521 = vmatprep.subr.mxu0 0.0
    %1522 = vmatpush2.msra.mxu0 0.0
    %1523 = vmatprep.subr.mxu0 0.0
    %1524 = vmatpush2.msra.mxu0 0.0
    %1525 = vmatprep.subr.mxu0 0.0
    %1526 = vmatpush2.msra.mxu0 0.0
    %1527 = vmatprep.subr.mxu0 0.0
    %1528 = vmatpush2.msra.mxu0 0.0
    %1529 = vmatprep.subr.mxu0 0.0
    %1530 = vmatpush2.msra.mxu0 0.0
    %1531 = vmatprep.subr.mxu0 0.0
    %1532 = vmatpush2.msra.mxu0 0.0
    %1533 = vmatprep.subr.mxu0 0.0
    %1534 = vmatpush2.msra.mxu0 0.0
    %1535 = vmatprep.mubr.f32.mxu0 0.0
    %1536 = vmatmul.mubr.f32.gmra.mxu0 %v1466
    %v1537 = vpop.f32.mrf.mxu0
    %v1538 = vadd.f32 0.0, %v1537
    %v1539 = vpop.f32.mrf.mxu0
    %1540 = vmatprep.mubr.f32.mxu0 0.0
    %1541 = vmatmul.mubr.f32.gmra.mxu0 %v1469
    %v1542 = vpop.f32.mrf.mxu0
    %v1543 = vadd.f32 0.0, %v1542
    %v1544 = vpop.f32.mrf.mxu0
    %1545 = vdwg.mxu0
    %v1547 = vsel %vm115, %v1158, 0
    %v1550 = vsel %vm115, %v1231, 0
    %1552 = vmatprep.subr.mxu0 0.0
    %1553 = vmatpush1.msra.mxu0 0.0
    %1554 = vmatprep.subr.mxu0 0.0
    %1555 = vmatpush1.msra.mxu0 0.0
    %1556 = vmatprep.subr.mxu0 0.0
    %1557 = vmatpush1.msra.mxu0 0.0
    %1558 = vmatprep.subr.mxu0 0.0
    %1559 = vmatpush1.msra.mxu0 0.0
    %1560 = vmatprep.subr.mxu0 0.0
    %1561 = vmatpush1.msra.mxu0 0.0
    %1562 = vmatprep.subr.mxu0 0.0
    %1563 = vmatpush1.msra.mxu0 0.0
    %1564 = vmatprep.subr.mxu0 0.0
    %1565 = vmatpush1.msra.mxu0 0.0
    %1566 = vmatprep.subr.mxu0 0.0
    %1567 = vmatpush1.msra.mxu0 0.0
    %1568 = vmatprep.subr.mxu0 0.0
    %1569 = vmatpush1.msra.mxu0 0.0
    %1570 = vmatprep.subr.mxu0 0.0
    %1571 = vmatpush1.msra.mxu0 0.0
    %1572 = vmatprep.subr.mxu0 0.0
    %1573 = vmatpush1.msra.mxu0 0.0
    %1574 = vmatprep.subr.mxu0 0.0
    %1575 = vmatpush1.msra.mxu0 0.0
    %1576 = vmatprep.subr.mxu0 0.0
    %1577 = vmatpush1.msra.mxu0 0.0
    %1578 = vmatprep.subr.mxu0 0.0
    %1579 = vmatpush1.msra.mxu0 0.0
    %1580 = vmatprep.subr.mxu0 0.0
    %1581 = vmatpush1.msra.mxu0 0.0
    %1582 = vmatprep.subr.mxu0 0.0
    %1583 = vmatpush1.msra.mxu0 %v1382
    %1584 = vmatprep.subr.mxu0 0.0
    %1585 = vmatpush2.msra.mxu0 0.0
    %1586 = vmatprep.subr.mxu0 0.0
    %1587 = vmatpush2.msra.mxu0 0.0
    %1588 = vmatprep.subr.mxu0 0.0
    %1589 = vmatpush2.msra.mxu0 0.0
    %1590 = vmatprep.subr.mxu0 0.0
    %1591 = vmatpush2.msra.mxu0 0.0
    %1592 = vmatprep.subr.mxu0 0.0
    %1593 = vmatpush2.msra.mxu0 0.0
    %1594 = vmatprep.subr.mxu0 0.0
    %1595 = vmatpush2.msra.mxu0 0.0
    %1596 = vmatprep.subr.mxu0 0.0
    %1597 = vmatpush2.msra.mxu0 0.0
    %1598 = vmatprep.subr.mxu0 0.0
    %1599 = vmatpush2.msra.mxu0 0.0
    %1600 = vmatprep.subr.mxu0 0.0
    %1601 = vmatpush2.msra.mxu0 0.0
    %1602 = vmatprep.subr.mxu0 0.0
    %1603 = vmatpush2.msra.mxu0 0.0
    %1604 = vmatprep.subr.mxu0 0.0
    %1605 = vmatpush2.msra.mxu0 0.0
    %1606 = vmatprep.subr.mxu0 0.0
    %1607 = vmatpush2.msra.mxu0 0.0
    %1608 = vmatprep.subr.mxu0 0.0
    %1609 = vmatpush2.msra.mxu0 0.0
    %1610 = vmatprep.subr.mxu0 0.0
    %1611 = vmatpush2.msra.mxu0 0.0
    %1612 = vmatprep.subr.mxu0 0.0
    %1613 = vmatpush2.msra.mxu0 0.0
    %1614 = vmatprep.subr.mxu0 0.0
    %1615 = vmatpush2.msra.mxu0 0.0
    %1616 = vmatprep.mubr.f32.mxu0 0.0
    %1617 = vmatmul.mubr.f32.gmra.mxu0 %v1547
    %v1618 = vpop.f32.mrf.mxu0
    %v1619 = vadd.f32 0.0, %v1618
    %v1620 = vpop.f32.mrf.mxu0
    %1621 = vmatprep.mubr.f32.mxu0 0.0
    %1622 = vmatmul.mubr.f32.gmra.mxu0 %v1550
    %v1623 = vpop.f32.mrf.mxu0
    %v1624 = vadd.f32 0.0, %v1623
    %v1625 = vpop.f32.mrf.mxu0
    %1626 = vdwg.mxu0
    %v1628 = vsel %vm115, %v1304, 0
    %v1631 = vsel %vm115, %v1377, 0
    %1633 = vmatprep.subr.mxu0 0.0
    %1634 = vmatpush1.msra.mxu0 0.0
    %1635 = vmatprep.subr.mxu0 0.0
    %1636 = vmatpush1.msra.mxu0 0.0
    %1637 = vmatprep.subr.mxu0 0.0
    %1638 = vmatpush1.msra.mxu0 0.0
    %1639 = vmatprep.subr.mxu0 0.0
    %1640 = vmatpush1.msra.mxu0 0.0
    %1641 = vmatprep.subr.mxu0 0.0
    %1642 = vmatpush1.msra.mxu0 0.0
    %1643 = vmatprep.subr.mxu0 0.0
    %1644 = vmatpush1.msra.mxu0 0.0
    %1645 = vmatprep.subr.mxu0 0.0
    %1646 = vmatpush1.msra.mxu0 0.0
    %1647 = vmatprep.subr.mxu0 0.0
    %1648 = vmatpush1.msra.mxu0 0.0
    %1649 = vmatprep.subr.mxu0 0.0
    %1650 = vmatpush1.msra.mxu0 0.0
    %1651 = vmatprep.subr.mxu0 0.0
    %1652 = vmatpush1.msra.mxu0 0.0
    %1653 = vmatprep.subr.mxu0 0.0
    %1654 = vmatpush1.msra.mxu0 0.0
    %1655 = vmatprep.subr.mxu0 0.0
    %1656 = vmatpush1.msra.mxu0 0.0
    %1657 = vmatprep.subr.mxu0 0.0
    %1658 = vmatpush1.msra.mxu0 0.0
    %1659 = vmatprep.subr.mxu0 0.0
    %1660 = vmatpush1.msra.mxu0 0.0
    %1661 = vmatprep.subr.mxu0 0.0
    %1662 = vmatpush1.msra.mxu0 0.0
    %1663 = vmatprep.subr.mxu0 0.0
    %1664 = vmatpush1.msra.mxu0 %v1383
    %1665 = vmatprep.subr.mxu0 0.0
    %1666 = vmatpush2.msra.mxu0 0.0
    %1667 = vmatprep.subr.mxu0 0.0
    %1668 = vmatpush2.msra.mxu0 0.0
    %1669 = vmatprep.subr.mxu0 0.0
    %1670 = vmatpush2.msra.mxu0 0.0
    %1671 = vmatprep.subr.mxu0 0.0
    %1672 = vmatpush2.msra.mxu0 0.0
    %1673 = vmatprep.subr.mxu0 0.0
    %1674 = vmatpush2.msra.mxu0 0.0
    %1675 = vmatprep.subr.mxu0 0.0
    %1676 = vmatpush2.msra.mxu0 0.0
    %1677 = vmatprep.subr.mxu0 0.0
    %1678 = vmatpush2.msra.mxu0 0.0
    %1679 = vmatprep.subr.mxu0 0.0
    %1680 = vmatpush2.msra.mxu0 0.0
    %1681 = vmatprep.subr.mxu0 0.0
    %1682 = vmatpush2.msra.mxu0 0.0
    %1683 = vmatprep.subr.mxu0 0.0
    %1684 = vmatpush2.msra.mxu0 0.0
    %1685 = vmatprep.subr.mxu0 0.0
    %1686 = vmatpush2.msra.mxu0 0.0
    %1687 = vmatprep.subr.mxu0 0.0
    %1688 = vmatpush2.msra.mxu0 0.0
    %1689 = vmatprep.subr.mxu0 0.0
    %1690 = vmatpush2.msra.mxu0 0.0
    %1691 = vmatprep.subr.mxu0 0.0
    %1692 = vmatpush2.msra.mxu0 0.0
    %1693 = vmatprep.subr.mxu0 0.0
    %1694 = vmatpush2.msra.mxu0 0.0
    %1695 = vmatprep.subr.mxu0 0.0
    %1696 = vmatpush2.msra.mxu0 0.0
    %1697 = vmatprep.mubr.f32.mxu0 0.0
    %1698 = vmatmul.mubr.f32.gmra.mxu0 %v1628
    %v1699 = vpop.f32.mrf.mxu0
    %v1700 = vadd.f32 0.0, %v1699
    %v1701 = vpop.f32.mrf.mxu0
    %1702 = vmatprep.mubr.f32.mxu0 0.0
    %1703 = vmatmul.mubr.f32.gmra.mxu0 %v1631
    %v1704 = vpop.f32.mrf.mxu0
    %v1705 = vadd.f32 0.0, %v1704
    %v1706 = vpop.f32.mrf.mxu0
    %1707 = vdwg.mxu0
    %vm1708 = vcmask 261120
    %v1709 = vsel %vm1708, %v1457, 0.0
    %v1710 = vsel %vm1708, %v1538, 0.0
    %v1711 = vadd.f32 %v1709, %v1710
    %v1712 = vsel %vm1708, %v1619, 0.0
    %v1713 = vadd.f32 %v1711, %v1712
    %v1714 = vsel %vm1708, %v1700, 0.0
    %v1715 = vadd.f32 %v1713, %v1714
    %v1716 = vsel %vm1708, %v1462, 0.0
    %v1717 = vsel %vm1708, %v1543, 0.0
    %v1718 = vadd.f32 %v1716, %v1717
    %v1719 = vsel %vm1708, %v1624, 0.0
    %v1720 = vadd.f32 %v1718, %v1719
    %v1721 = vsel %vm1708, %v1705, 0.0
    %v1722 = vadd.f32 %v1720, %v1721
    %v1723 = vlaneseq
    %v1724 = vshrl.u32 %v1723, 7
    %v1725 = vsub.s32 0, %v1724
    %v1726 = vrot.slane %v89, %v1725
    %v1727 = vadd.f32 %v1715, %v1726
    %v1728 = vadd.f32 %v1722, %v1726
    %v1729 = vld [vmem:[#allocation5] sm:$0xff]
    %v1730 = vld [vmem:[#allocation5 + $0x8] sm:$0xff]
    %v1731 = vadd.f32 %v1727, %v1729
    %v1732 = vadd.f32 %v1728, %v1730
    %v1733 = vsel %vm1708, %v1731, 0.0
    %1734 = vadd.xlane.f32.xlu0 %v1733
    %v1735 = vpop.xlane.xlu0 %1734
    %v1736 = vsel %vm1708, %v1732, 0.0
    %1737 = vadd.xlane.f32.xlu0 %v1736
    %v1738 = vpop.xlane.xlu0 %1737
    %v1739 = vrcp.pop 32.0
    %v1740 = vmul.f32 %v1735, %v1739
    %v1741 = vmul.f32 %v1738, %v1739
    %v1742 = vsub.f32 %v1731, %v1740
    %v1743 = vsub.f32 %v1732, %v1741
    %v1744 = vmul.f32 %v1742, %v1742
    %v1745 = vmul.f32 %v1743, %v1743
    %v1746 = vsel %vm1708, %v1744, 0.0
    %1747 = vadd.xlane.f32.xlu0 %v1746
    %v1748 = vpop.xlane.xlu0 %1747
    %v1749 = vsel %vm1708, %v1745, 0.0
    %1750 = vadd.xlane.f32.xlu0 %v1749
    %v1751 = vpop.xlane.xlu0 %1750
    %v1752 = vmul.f32 %v1748, %v1739
    %v1753 = vmul.f32 %v1751, %v1739
    %v1754 = vadd.f32 %v1752, 1e-05
    %v1755 = vadd.f32 %v1753, 1e-05
    %v1756 = vrsqrt.pop %v1754
    %v1757 = vrsqrt.pop %v1755
    %v1758 = vmul.f32 %v1742, %v1756
    %v1759 = vmul.f32 %v1743, %v1757
    %v1760 = vlaneseq
    %v1761 = vshrl.u32 %v1760, 7
    %v1762 = vsub.s32 1, %v1761
    %v1763 = vrot.slane %v89, %v1762
    %v1764 = vmul.f32 %v1758, %v1763
    %v1765 = vmul.f32 %v1759, %v1763
    %v1766 = vlaneseq
    %v1767 = vshrl.u32 %v1766, 7
    %v1768 = vsub.s32 2, %v1767
    %v1769 = vrot.slane %v89, %v1768
    %v1770 = vadd.f32 %v1764, %v1769
    %v1771 = vadd.f32 %v1765, %v1769
    %v1772 = vld [vmem:[#allocation8] sm:$0xff]
    %v1773 = vld [vmem:[#allocation8 + $0x8] sm:$0xff]
    %v1774 = vld [vmem:[#allocation8 + $0x10] sm:$0xff]
    %v1775 = vld [vmem:[#allocation8 + $0x18] sm:$0xff]
    %v1776 = vld [vmem:[%s7] sm:$0x1]
    %v1778 = vlaneseq
    %v1779 = vshrl.u32 %v1778, 7
    %v1780 = vsub.s32 0, %v1779
    %v1781 = vrot.slane %v1776, %v1780
    %v1784 = vsel %vm1708, %v1770, 0
    %v1787 = vsel %vm1708, %v1771, 0
    %1789 = vmatprep.subr.mxu0 0.0
    %1790 = vmatpush1.msra.mxu0 0.0
    %1791 = vmatprep.subr.mxu0 0.0
    %1792 = vmatpush1.msra.mxu0 0.0
    %1793 = vmatprep.subr.mxu0 0.0
    %1794 = vmatpush1.msra.mxu0 0.0
    %1795 = vmatprep.subr.mxu0 0.0
    %1796 = vmatpush1.msra.mxu0 0.0
    %1797 = vmatprep.subr.mxu0 0.0
    %1798 = vmatpush1.msra.mxu0 0.0
    %1799 = vmatprep.subr.mxu0 0.0
    %1800 = vmatpush1.msra.mxu0 0.0
    %1801 = vmatprep.subr.mxu0 0.0
    %1802 = vmatpush1.msra.mxu0 0.0
    %1803 = vmatprep.subr.mxu0 0.0
    %1804 = vmatpush1.msra.mxu0 0.0
    %1805 = vmatprep.subr.mxu0 0.0
    %1806 = vmatpush1.msra.mxu0 0.0
    %1807 = vmatprep.subr.mxu0 0.0
    %1808 = vmatpush1.msra.mxu0 0.0
    %1809 = vmatprep.subr.mxu0 0.0
    %1810 = vmatpush1.msra.mxu0 0.0
    %1811 = vmatprep.subr.mxu0 0.0
    %1812 = vmatpush1.msra.mxu0 0.0
    %1813 = vmatprep.subr.mxu0 0.0
    %1814 = vmatpush1.msra.mxu0 %v1775
    %1815 = vmatprep.subr.mxu0 0.0
    %1816 = vmatpush1.msra.mxu0 %v1774
    %1817 = vmatprep.subr.mxu0 0.0
    %1818 = vmatpush1.msra.mxu0 %v1773
    %1819 = vmatprep.subr.mxu0 0.0
    %1820 = vmatpush1.msra.mxu0 %v1772
    %1821 = vmatprep.subr.mxu0 0.0
    %1822 = vmatpush2.msra.mxu0 0.0
    %1823 = vmatprep.subr.mxu0 0.0
    %1824 = vmatpush2.msra.mxu0 0.0
    %1825 = vmatprep.subr.mxu0 0.0
    %1826 = vmatpush2.msra.mxu0 0.0
    %1827 = vmatprep.subr.mxu0 0.0
    %1828 = vmatpush2.msra.mxu0 0.0
    %1829 = vmatprep.subr.mxu0 0.0
    %1830 = vmatpush2.msra.mxu0 0.0
    %1831 = vmatprep.subr.mxu0 0.0
    %1832 = vmatpush2.msra.mxu0 0.0
    %1833 = vmatprep.subr.mxu0 0.0
    %1834 = vmatpush2.msra.mxu0 0.0
    %1835 = vmatprep.subr.mxu0 0.0
    %1836 = vmatpush2.msra.mxu0 0.0
    %1837 = vmatprep.subr.mxu0 0.0
    %1838 = vmatpush2.msra.mxu0 0.0
    %1839 = vmatprep.subr.mxu0 0.0
    %1840 = vmatpush2.msra.mxu0 0.0
    %1841 = vmatprep.subr.mxu0 0.0
    %1842 = vmatpush2.msra.mxu0 0.0
    %1843 = vmatprep.subr.mxu0 0.0
    %1844 = vmatpush2.msra.mxu0 0.0
    %1845 = vmatprep.subr.mxu0 0.0
    %1846 = vmatpush2.msra.mxu0 0.0
    %1847 = vmatprep.subr.mxu0 0.0
    %1848 = vmatpush2.msra.mxu0 0.0
    %1849 = vmatprep.subr.mxu0 0.0
    %1850 = vmatpush2.msra.mxu0 0.0
    %1851 = vmatprep.subr.mxu0 0.0
    %1852 = vmatpush2.msra.mxu0 0.0
    %1853 = vmatprep.mubr.f32.mxu0 0.0
    %1854 = vmatmul.mubr.f32.gmra.mxu0 %v1784
    %v1855 = vpop.f32.mrf.mxu0
    %v1856 = vadd.f32 %v1781, %v1855
    %v1857 = vpop.f32.mrf.mxu0
    %1858 = vmatprep.mubr.f32.mxu0 0.0
    %1859 = vmatmul.mubr.f32.gmra.mxu0 %v1787
    %v1860 = vpop.f32.mrf.mxu0
    %v1861 = vadd.f32 %v1781, %v1860
    %v1862 = vpop.f32.mrf.mxu0
    %1863 = vdwg.mxu0
    %v1864 = vmax.f32 %v1856, 0.0
    %v1865 = vmax.f32 %v1861, 0.0
    %v1866 = vld [vmem:[%s8] sm:$0xff]
    %v1867 = vld [vmem:[%s8 + $0x8] sm:$0xff]
    %v1868 = vld [vmem:[%s8 + $0x10] sm:$0xff]
    %v1869 = vld [vmem:[%s8 + $0x18] sm:$0xff]
    %v1870 = vld [vmem:[%s8 + $0x20] sm:$0xff]
    %v1871 = vld [vmem:[%s8 + $0x28] sm:$0xff]
    %v1872 = vld [vmem:[%s8 + $0x30] sm:$0xff]
    %v1873 = vld [vmem:[%s8 + $0x38] sm:$0xff]
    %v1874 = vld [vmem:[%s8 + $0x40] sm:$0xff]
    %v1875 = vld [vmem:[%s8 + $0x48] sm:$0xff]
    %v1876 = vld [vmem:[%s8 + $0x50] sm:$0xff]
    %v1877 = vld [vmem:[%s8 + $0x58] sm:$0xff]
    %v1878 = vld [vmem:[%s8 + $0x60] sm:$0xff]
    %v1879 = vld [vmem:[%s8 + $0x68] sm:$0xff]
    %v1880 = vld [vmem:[%s8 + $0x70] sm:$0xff]
    %v1881 = vld [vmem:[%s8 + $0x78] sm:$0xff]
    %v1882 = vlaneseq
    %v1883 = vshrl.u32 %v1882, 7
    %v1884 = vsub.s32 3, %v1883
    %v1885 = vrot.slane %v89, %v1884
    %1886 = vmatprep.subr.mxu0 0.0
    %1887 = vmatpush1.msra.mxu0 %v1881
    %1888 = vmatprep.subr.mxu0 0.0
    %1889 = vmatpush1.msra.mxu0 %v1880
    %1890 = vmatprep.subr.mxu0 0.0
    %1891 = vmatpush1.msra.mxu0 %v1879
    %1892 = vmatprep.subr.mxu0 0.0
    %1893 = vmatpush1.msra.mxu0 %v1878
    %1894 = vmatprep.subr.mxu0 0.0
    %1895 = vmatpush1.msra.mxu0 %v1877
    %1896 = vmatprep.subr.mxu0 0.0
    %1897 = vmatpush1.msra.mxu0 %v1876
    %1898 = vmatprep.subr.mxu0 0.0
    %1899 = vmatpush1.msra.mxu0 %v1875
    %1900 = vmatprep.subr.mxu0 0.0
    %1901 = vmatpush1.msra.mxu0 %v1874
    %1902 = vmatprep.subr.mxu0 0.0
    %1903 = vmatpush1.msra.mxu0 %v1873
    %1904 = vmatprep.subr.mxu0 0.0
    %1905 = vmatpush1.msra.mxu0 %v1872
    %1906 = vmatprep.subr.mxu0 0.0
    %1907 = vmatpush1.msra.mxu0 %v1871
    %1908 = vmatprep.subr.mxu0 0.0
    %1909 = vmatpush1.msra.mxu0 %v1870
    %1910 = vmatprep.subr.mxu0 0.0
    %1911 = vmatpush1.msra.mxu0 %v1869
    %1912 = vmatprep.subr.mxu0 0.0
    %1913 = vmatpush1.msra.mxu0 %v1868
    %1914 = vmatprep.subr.mxu0 0.0
    %1915 = vmatpush1.msra.mxu0 %v1867
    %1916 = vmatprep.subr.mxu0 0.0
    %1917 = vmatpush1.msra.mxu0 %v1866
    %1918 = vmatprep.subr.mxu0 0.0
    %1919 = vmatpush2.msra.mxu0 0.0
    %1920 = vmatprep.subr.mxu0 0.0
    %1921 = vmatpush2.msra.mxu0 0.0
    %1922 = vmatprep.subr.mxu0 0.0
    %1923 = vmatpush2.msra.mxu0 0.0
    %1924 = vmatprep.subr.mxu0 0.0
    %1925 = vmatpush2.msra.mxu0 0.0
    %1926 = vmatprep.subr.mxu0 0.0
    %1927 = vmatpush2.msra.mxu0 0.0
    %1928 = vmatprep.subr.mxu0 0.0
    %1929 = vmatpush2.msra.mxu0 0.0
    %1930 = vmatprep.subr.mxu0 0.0
    %1931 = vmatpush2.msra.mxu0 0.0
    %1932 = vmatprep.subr.mxu0 0.0
    %1933 = vmatpush2.msra.mxu0 0.0
    %1934 = vmatprep.subr.mxu0 0.0
    %1935 = vmatpush2.msra.mxu0 0.0
    %1936 = vmatprep.subr.mxu0 0.0
    %1937 = vmatpush2.msra.mxu0 0.0
    %1938 = vmatprep.subr.mxu0 0.0
    %1939 = vmatpush2.msra.mxu0 0.0
    %1940 = vmatprep.subr.mxu0 0.0
    %1941 = vmatpush2.msra.mxu0 0.0
    %1942 = vmatprep.subr.mxu0 0.0
    %1943 = vmatpush2.msra.mxu0 0.0
    %1944 = vmatprep.subr.mxu0 0.0
    %1945 = vmatpush2.msra.mxu0 0.0
    %1946 = vmatprep.subr.mxu0 0.0
    %1947 = vmatpush2.msra.mxu0 0.0
    %1948 = vmatprep.subr.mxu0 0.0
    %1949 = vmatpush2.msra.mxu0 0.0
    %1950 = vmatprep.mubr.f32.mxu0 0.0
    %1951 = vmatmul.mubr.f32.gmra.mxu0 %v1864
    %v1952 = vpop.f32.mrf.mxu0
    %v1953 = vadd.f32 %v1885, %v1952
    %v1954 = vpop.f32.mrf.mxu0
    %1955 = vmatprep.mubr.f32.mxu0 0.0
    %1956 = vmatmul.mubr.f32.gmra.mxu0 %v1865
    %v1957 = vpop.f32.mrf.mxu0
    %v1958 = vadd.f32 %v1885, %v1957
    %v1959 = vpop.f32.mrf.mxu0
    %1960 = vdwg.mxu0
    %v1961 = vadd.f32 %v1953, %v1770
    %v1962 = vadd.f32 %v1958, %v1771
    %v1963 = vsel %vm1708, %v1961, 0.0
    %1964 = vadd.xlane.f32.xlu0 %v1963
    %v1965 = vpop.xlane.xlu0 %1964
    %v1966 = vsel %vm1708, %v1962, 0.0
    %1967 = vadd.xlane.f32.xlu0 %v1966
    %v1968 = vpop.xlane.xlu0 %1967
    %v1969 = vmul.f32 %v1965, %v1739
    %v1970 = vmul.f32 %v1968, %v1739
    %v1971 = vsub.f32 %v1961, %v1969
    %v1972 = vsub.f32 %v1962, %v1970
    %v1973 = vmul.f32 %v1971, %v1971
    %v1974 = vmul.f32 %v1972, %v1972
    %v1975 = vsel %vm1708, %v1973, 0.0
    %1976 = vadd.xlane.f32.xlu0 %v1975
    %v1977 = vpop.xlane.xlu0 %1976
    %v1978 = vsel %vm1708, %v1974, 0.0
    %1979 = vadd.xlane.f32.xlu0 %v1978
    %v1980 = vpop.xlane.xlu0 %1979
    %v1981 = vmul.f32 %v1977, %v1739
    %v1982 = vmul.f32 %v1980, %v1739
    %v1983 = vadd.f32 %v1981, 1e-05
    %v1984 = vadd.f32 %v1982, 1e-05
    %v1985 = vrsqrt.pop %v1983
    %v1986 = vrsqrt.pop %v1984
    %v1987 = vmul.f32 %v1971, %v1985
    %v1988 = vmul.f32 %v1972, %v1986
    %v1989 = vlaneseq
    %v1990 = vshrl.u32 %v1989, 7
    %v1991 = vsub.s32 4, %v1990
    %v1992 = vrot.slane %v89, %v1991
    %v1993 = vmul.f32 %v1987, %v1992
    %v1994 = vmul.f32 %v1988, %v1992
    %v1995 = vlaneseq
    %v1996 = vshrl.u32 %v1995, 7
    %v1997 = vsub.s32 5, %v1996
    %v1998 = vrot.slane %v89, %v1997
    %v1999 = vadd.f32 %v1993, %v1998
    %v2000 = vadd.f32 %v1994, %v1998
    %2001 = vst.msk [vmem:[#allocation10] sm:$0xff] %vm1708, %v1999
    %2002 = vst.msk [vmem:[#allocation10 + $0x8] sm:$0xff] %vm1708, %v2000
    // Predicated region
    $region58: #{tpu_custom_call.1} parent=1 // pred_check
      _
    $region59: #{tpu_custom_call.1} parent=1 // pred_check_branch
      %2004 = sbr.rel (0) target = $region61
    $region60: #{tpu_custom_call.1} parent=1 // pred_region
      %s2006 = ssub.s32 256, 256
      %2007 = vsyncadd [#allocation4], %s2006
      %s2008 = sshll.u32 [#allocation10], 4
      %s2009 = int_to_ptr.vmem [resolvable:$true] %s2008
      %2014 = dma.vmem_to_hbm [thread:$0]  %s2009, 256, %s10, [#allocation4], 128, 128, 8
    $region61: #{tpu_custom_call.1} parent=1 // pred_fallthru
      _
    // Predicated region
    $region62: #{tpu_custom_call.1} parent=1 // pred_check
      _
    $region63: #{tpu_custom_call.1} parent=1 // pred_check_branch
      %2016 = sbr.rel (0) target = $region65
    $region64: #{tpu_custom_call.1} parent=1 // pred_region
      %2017 = dma.done [#allocation4], 256
    $region65: #{tpu_custom_call.1} parent=1 // pred_fallthru
      _
    %2018 = vsyncpa [#allocation3], 1
    %2019 = vsyncpa [#allocation6], 1
    %2020 = vsyncpa [#allocation9], 1
    %2021 = vsyncpa [#allocation4], 1

</llo_original>
